<compile_context>
chip_gen: v5e
topology: v5e:2x2
jax: 0.10.0
libtpu: 0.0.40
codegen_flags: <defaults>
</compile_context>

<pallas_src>
import math

import numpy as np
import jax
import jax.numpy as jnp
from jax import lax
from jax.experimental import pallas as pl
from jax.experimental.pallas import tpu as pltpu

# ---------------- configuration consistent with the module -------------------
EMBED_DIM = 32          # config.embed_dim
HIDDEN_DIM = 64         # config.hidden_dim (FFN inner dim)
NUM_EMBEDDINGS = 50     # config.num_embeddings (vocab)
NUM_MAX_POSITIONS = 16  # config.num_max_positions
NUM_HEADS = 4           # config.num_heads
NUM_LAYERS = 2          # config.num_layers
NUM_CLASSES = 3         # fine_tuning_config.num_classes
INIT_RANGE = 0.1        # config.init_range
CAUSAL = True           # causal = not config.mlm  (mlm = False)
LN_EPS = 1e-12

SEQ_LEN = 8
BATCH = 2
HEAD_DIM = EMBED_DIM // NUM_HEADS

D = EMBED_DIM
HF = HIDDEN_DIM
S = SEQ_LEN
B = BATCH
N = S * B                      # 16 token rows, seq-major: n = s*B + b
M = NUM_HEADS * N              # 64 packed score columns: m = h*N + t
VOCAB_PAD = 56                 # vocab rows padded to a multiple of 8
OUT_LANES = 128                # lane-dense kernel output width

# ---------------- packed constant-slab row layout (128 lanes wide) -----------
R_EMB = 0                        # (VOCAB_PAD, D)   token table (zero padded)
R_POS = R_EMB + VOCAB_PAD        # (N, D)           per-row positional add
R_BIAS = R_POS + N               # (N, M)           causal + same-batch bias
R_HMASK = R_BIAS + N             # (M, 2D)          per-head k|v lane select
R_G = R_HMASK + M                # (M, M)           blockwise-sum matrix
R_REP = R_G + M                  # (M, N)           kv replication matrix
R_SEL = R_REP + M                # (B, N)           pooling batch selector
R_CLF = R_SEL + 8                # (D+1, 128)       fused classifier (bias last)
R_LAYERS = R_CLF + 40            # per-layer blocks start here

OFF_WQ = 0                       # (D, M)   cols 0:D = Wq^T * scale, rest 0
OFF_WKV = 32                     # (D, M)   cols 0:D = Wk^T, cols D:2D = Wv^T
OFF_WO = 64                      # (M, D)   rows D:2D = Wo^T, rows 0:D = 0
OFF_F1 = 128                     # (D, HF)
OFF_F2 = 160                     # (HF, D)
OFF_VEC = 224                    # (9, <=M) small vectors (see prepare)
LAYER_ROWS = 240
TOTAL_ROWS = R_LAYERS + NUM_LAYERS * LAYER_ROWS    # 808


# ------------------------------- kernel --------------------------------------
def _kernel(tok_ref, mask_ref, slab_ref, out_ref):
    f32 = jnp.float32

    # ---- embeddings: one-hot gather on the MXU + prepacked positional add ----
    tok = tok_ref[...]                                           # (N, 1) i32
    col = lax.broadcasted_iota(jnp.int32, (N, VOCAB_PAD), 1)
    onehot = (tok == col).astype(f32)                            # (N, Vp)
    h = jnp.dot(onehot, slab_ref[R_EMB:R_EMB + VOCAB_PAD, 0:D],
                preferred_element_type=f32)                      # (N, D)
    h = h + slab_ref[R_POS:R_POS + N, 0:D]                       # + pos_emb[s]
    # TODO(synk): nn.Dropout is identity here (inference / dropout=0.0)

    # ---- prepacked, layer-invariant attention constants ----
    bias = slab_ref[R_BIAS:R_BIAS + N, 0:M]                      # (N, M)
    hmask = slab_ref[R_HMASK:R_HMASK + M, 0:2 * D]               # (M, 2D)
    gmat = slab_ref[R_G:R_G + M, 0:M]                            # (M, M)
    rep = slab_ref[R_REP:R_REP + M, 0:N]                         # (M, N)

    def layer_norm(x, g, b):
        mu = jnp.mean(x, axis=-1, keepdims=True)
        ms = jnp.mean(x * x, axis=-1, keepdims=True)             # independent
        var = ms - mu * mu
        return (x - mu) * lax.rsqrt(var + LN_EPS) * g + b

    # static Python loop over layers; all weight slices are static views of
    # the single resident slab.
    for l in range(NUM_LAYERS):
        base = R_LAYERS + l * LAYER_ROWS
        wq = slab_ref[base + OFF_WQ:base + OFF_WQ + D, 0:M]      # (D, M)
        wkv = slab_ref[base + OFF_WKV:base + OFF_WKV + D, 0:M]   # (D, M)
        wo = slab_ref[base + OFF_WO:base + OFF_WO + M, 0:D]      # (M, D)
        f1 = slab_ref[base + OFF_F1:base + OFF_F1 + D, 0:HF]     # (D, HF)
        f2 = slab_ref[base + OFF_F2:base + OFF_F2 + HF, 0:D]     # (HF, D)
        vec = slab_ref[base + OFF_VEC:base + OFF_VEC + 9, :]     # (9, 128)
        g1, b1 = vec[0:1, 0:D], vec[1:2, 0:D]
        g2, b2 = vec[2:3, 0:D], vec[3:4, 0:D]
        bq = vec[4:5, 0:M]          # scaled q bias in lanes 0:D, zeros after
        bkv = vec[5:6, 0:M]         # k bias lanes 0:D, v bias lanes D:2D
        bo = vec[6:7, 0:D]
        bf1 = vec[7:8, 0:HF]
        bf2 = vec[8:9, 0:D]

        # -- multi-head self-attention (residual on the normalized h, exactly
        #    as in the PyTorch module); packed-head formulation:
        hn = layer_norm(h, g1, b1)
        q = jnp.dot(hn, wq, preferred_element_type=f32) + bq      # (N, M) lanes D:2D == 0
        kv = jnp.dot(hn, wkv, preferred_element_type=f32) + bkv   # (N, 2D)
        # replicate kv once per head and keep only that head's k/v lanes
        kvx = jnp.dot(rep, kv, preferred_element_type=f32) * hmask  # (M, 2D)
        # scores: q lanes 0:D hit k lanes 0:D of the matching head block only
        s = jnp.einsum('nd,md->nm', q, kvx,
                       preferred_element_type=f32) + bias          # (N, M)
        # blockwise softmax: one row-wide max (same constant per 16-lane head
        # block -> per-block softmax unchanged), block sums via constant matmul
        mrow = jnp.max(s, axis=-1, keepdims=True)
        e = jnp.exp(s - mrow)                                      # masked -> 0
        denom = jnp.dot(e, gmat, preferred_element_type=f32)       # (N, M)
        pr = e * pl.reciprocal(denom, approx=True)
        # context: lanes D:2D hold per-head context, lanes 0:D are junk that
        # the zero rows of wo discard
        ctx = jnp.dot(pr, kvx, preferred_element_type=f32)         # (N, 2D)
        attn = jnp.dot(ctx, wo, preferred_element_type=f32) + bo   # (N, D)
        h = attn + hn                                              # residual 1

        # -- feed-forward
        hn = layer_norm(h, g2, b2)
        a1 = jnp.maximum(jnp.dot(hn, f1, preferred_element_type=f32) + bf1,
                         0.0)
        h = jnp.dot(a1, f2, preferred_element_type=f32) + bf2 + hn  # residual 2

    # ---- masked pooling (constant selector matmul) + fused classifier ----
    hm = h * mask_ref[...]                                         # (N, D)
    pooled = jnp.dot(slab_ref[R_SEL:R_SEL + B, 0:N], hm,
                     preferred_element_type=f32)                   # (B, D)
    clf = slab_ref[R_CLF:R_CLF + D + 1, :]                         # (D+1, 128)
    logits = jnp.dot(pooled, clf[0:D, :],
                     preferred_element_type=f32) + clf[D:D + 1, :]
    out_ref[...] = logits.astype(out_ref.dtype)


# ------------------------------ parameters -----------------------------------
def init_params(key):
    ks = jax.random.split(key, 10)

    def normal(k, shape):
        return (INIT_RANGE *
                jax.random.normal(k, shape, jnp.float32)).astype(jnp.float32)

    L = NUM_LAYERS
    return dict(
        tok_emb=normal(ks[0], (NUM_EMBEDDINGS, D)),
        pos_emb=normal(ks[1], (NUM_MAX_POSITIONS, D)),
        ln1_w=normal(ks[2], (L, D)),
        ln1_b=jnp.zeros((L, D), jnp.float32),
        inproj_w=normal(ks[3], (L, 3 * D, D)),
        inproj_b=jnp.zeros((L, 3 * D), jnp.float32),
        outproj_w=normal(ks[4], (L, D, D)),
        outproj_b=jnp.zeros((L, D), jnp.float32),
        ln2_w=normal(ks[5], (L, D)),
        ln2_b=jnp.zeros((L, D), jnp.float32),
        ff1_w=normal(ks[6], (L, HF, D)),
        ff1_b=jnp.zeros((L, HF), jnp.float32),
        ff2_w=normal(ks[7], (L, D, HF)),
        ff2_b=jnp.zeros((L, D), jnp.float32),
        pre_w=normal(ks[8], (16, D)),
        pre_b=jnp.zeros((16,), jnp.float32),
        clf_w=normal(ks[9], (NUM_CLASSES, 16)),
        clf_b=jnp.zeros((NUM_CLASSES,), jnp.float32),
    )


def prepare_kernel_params(p):
    """One-time repack of PyTorch-layout params into ONE lane-dense slab."""
    scale = 1.0 / math.sqrt(HEAD_DIM)
    slab = np.zeros((TOTAL_ROWS, OUT_LANES), np.float32)

    # embeddings (vocab table, zero-padded) + per-row positional add
    slab[R_EMB:R_EMB + NUM_EMBEDDINGS, 0:D] = np.asarray(p['tok_emb'])
    pos = np.asarray(p['pos_emb'])
    for n in range(N):
        slab[R_POS + n, 0:D] = pos[n // B]                 # row n = s*B + b

    # attention bias: 0 where same batch AND causal, else -1e30
    for n in range(N):
        for m in range(M):
            t = m % N
            ok = (t % B == n % B) and (t // B <= n // B)
            slab[R_BIAS + n, m] = 0.0 if ok else -1e30
    # per-head lane select for the replicated k|v rows
    for m in range(M):
        hh = m // N
        for d in range(2 * D):
            if (d % D) // HEAD_DIM == hh:
                slab[R_HMASK + m, d] = 1.0
    # blockwise-sum matrix (softmax denominators per 16-lane head block)
    for j in range(M):
        blk = j // N
        slab[R_G + j, blk * N:(blk + 1) * N] = 1.0
    # kv replication matrix (4 vertical copies)
    for m in range(M):
        slab[R_REP + m, m % N] = 1.0
    # pooling batch selector
    for n in range(N):
        slab[R_SEL + (n % B), n] = 1.0

    # fused classifier head (no nonlinearity between the two linears)
    w_f = np.asarray(p['pre_w']).T @ np.asarray(p['clf_w']).T        # (D, C)
    b_f = np.asarray(p['pre_b']) @ np.asarray(p['clf_w']).T \
        + np.asarray(p['clf_b'])                                     # (C,)
    slab[R_CLF:R_CLF + D, 0:NUM_CLASSES] = w_f
    slab[R_CLF + D, 0:NUM_CLASSES] = b_f

    inproj_w = np.asarray(p['inproj_w'])
    inproj_b = np.asarray(p['inproj_b'])
    outproj_w = np.asarray(p['outproj_w'])
    for l in range(NUM_LAYERS):
        base = R_LAYERS + l * LAYER_ROWS
        slab[base + OFF_WQ:base + OFF_WQ + D, 0:D] = \
            inproj_w[l, 0:D, :].T * scale                  # scale folded in
        slab[base + OFF_WKV:base + OFF_WKV + D, 0:D] = inproj_w[l, D:2 * D, :].T
        slab[base + OFF_WKV:base + OFF_WKV + D, D:2 * D] = \
            inproj_w[l, 2 * D:3 * D, :].T
        slab[base + OFF_WO + D:base + OFF_WO + 2 * D, 0:D] = outproj_w[l].T
        slab[base + OFF_F1:base + OFF_F1 + D, 0:HF] = np.asarray(p['ff1_w'])[l].T
        slab[base + OFF_F2:base + OFF_F2 + HF, 0:D] = np.asarray(p['ff2_w'])[l].T
        vb = base + OFF_VEC
        slab[vb + 0, 0:D] = np.asarray(p['ln1_w'])[l]
        slab[vb + 1, 0:D] = np.asarray(p['ln1_b'])[l]
        slab[vb + 2, 0:D] = np.asarray(p['ln2_w'])[l]
        slab[vb + 3, 0:D] = np.asarray(p['ln2_b'])[l]
        slab[vb + 4, 0:D] = inproj_b[l, 0:D] * scale                 # bq scaled
        slab[vb + 5, 0:D] = inproj_b[l, D:2 * D]                     # bk
        slab[vb + 5, D:2 * D] = inproj_b[l, 2 * D:3 * D]             # bv
        slab[vb + 6, 0:D] = np.asarray(p['outproj_b'])[l]
        slab[vb + 7, 0:HF] = np.asarray(p['ff1_b'])[l]
        slab[vb + 8, 0:D] = np.asarray(p['ff2_b'])[l]

    return jnp.asarray(slab)


# ------------------------------- wrapper --------------------------------------
@jax.jit
def forward_pallas(x_tokens, clf_tokens_mask, slab):
    """x_tokens: [S, B] int32, clf_tokens_mask: [S, B] (PyTorch layout)."""
    # row-major flatten keeps the in-kernel row order n = s*B + b; both
    # reshapes are free at the XLA level (no transpose, no gather).
    tokens = x_tokens.reshape(N, 1).astype(jnp.int32)
    mask = clf_tokens_mask.reshape(N, 1).astype(jnp.float32)

    vmem = pl.BlockSpec(memory_space=pltpu.MemorySpace.VMEM)
    out = pl.pallas_call(
        _kernel,
        out_shape=jax.ShapeDtypeStruct((B, OUT_LANES), jnp.float32),
        in_specs=[vmem, vmem, vmem],
        out_specs=vmem,
    )(tokens, mask, slab)
    return out[:, :NUM_CLASSES]


# --------------------------- pure-JAX reference -------------------------------
def forward_reference(x_tokens, clf_tokens_mask, p):
    Sl, Bl = x_tokens.shape
    h = p['tok_emb'][x_tokens] + p['pos_emb'][jnp.arange(Sl)][:, None, :]
    bias = jnp.where(jnp.triu(jnp.ones((Sl, Sl), bool), k=1), -jnp.inf, 0.0) \
        if CAUSAL else jnp.zeros((Sl, Sl))

    def ln(x, g, b):
        mu = x.mean(-1, keepdims=True)
        var = ((x - mu) ** 2).mean(-1, keepdims=True)
        return (x - mu) / jnp.sqrt(var + LN_EPS) * g + b

    for l in range(NUM_LAYERS):
        hn = ln(h, p['ln1_w'][l], p['ln1_b'][l])
        qkv = hn @ p['inproj_w'][l].T + p['inproj_b'][l]
        q, k, v = jnp.split(qkv, 3, axis=-1)
        q = q.reshape(Sl, Bl, NUM_HEADS, HEAD_DIM) / math.sqrt(HEAD_DIM)
        k = k.reshape(Sl, Bl, NUM_HEADS, HEAD_DIM)
        v = v.reshape(Sl, Bl, NUM_HEADS, HEAD_DIM)
        s = jnp.einsum('sbhd,tbhd->bhst', q, k) + bias
        pm = jax.nn.softmax(s, axis=-1)
        ctx = jnp.einsum('bhst,tbhd->sbhd', pm, v).reshape(Sl, Bl, D)
        attn = ctx @ p['outproj_w'][l].T + p['outproj_b'][l]
        h = attn + hn
        hn = ln(h, p['ln2_w'][l], p['ln2_b'][l])
        ff = jnp.maximum(hn @ p['ff1_w'][l].T + p['ff1_b'][l], 0.0)
        ff = ff @ p['ff2_w'][l].T + p['ff2_b'][l]
        h = ff + hn
    pooled = (h * clf_tokens_mask[:, :, None].astype(jnp.float32)).sum(0)
    pre = pooled @ p['pre_w'].T + p['pre_b']
    return pre @ p['clf_w'].T + p['clf_b']


# --------------------------------- main ---------------------------------------
if __name__ == "__main__":
    key = jax.random.PRNGKey(0)
    kp, kx, km = jax.random.split(key, 3)
    params = init_params(kp)
    slab = prepare_kernel_params(params)          # one-time repack, one DMA

    x_tokens = jax.random.randint(kx, (SEQ_LEN, BATCH), 0, NUM_EMBEDDINGS,
                                  dtype=jnp.int32)
    clf_mask = jax.random.bernoulli(km, 0.5, (SEQ_LEN, BATCH)).astype(
        jnp.float32)

    logits = forward_pallas(x_tokens, clf_mask, slab)
    logits = jax.block_until_ready(logits)

    ref = forward_reference(x_tokens, clf_mask, params)
    assert logits.shape == (BATCH, NUM_CLASSES)
    assert bool(jnp.all(jnp.isfinite(logits)))
    assert bool(jnp.allclose(logits, ref, atol=2e-3, rtol=2e-2)), (logits, ref)

    print("KERNEL_OK")
</pallas_src>

<mosaic_0001>
module attributes {stable_mosaic.version = 11 : i64} {
  func.func @_kernel(%arg0: memref<16x1xi32, #tpu.memory_space<vmem>>, %arg1: memref<16x1xf32, #tpu.memory_space<vmem>>, %arg2: memref<808x128xf32, #tpu.memory_space<vmem>>, %arg3: memref<2x128xf32, #tpu.memory_space<vmem>>) attributes {dimension_semantics = [], scalar_prefetch = 0 : i64, scratch_operands = 0 : i64, tpu.core_type = #tpu.core_type<tc>} {
    %c0 = arith.constant 0 : index
    %c0_0 = arith.constant 0 : index
    %0 = vector.load %arg0[%c0, %c0_0] : memref<16x1xi32, #tpu.memory_space<vmem>>, vector<16x1xi32>
    %1 = tpu.iota {dimensions = array<i32: 1>} : vector<16x56xi32>
    %2 = vector.broadcast %0 : vector<16x1xi32> to vector<16x56xi32>
    %3 = arith.cmpi eq, %2, %1 : vector<16x56xi32>
    %4 = arith.extui %3 : vector<16x56xi1> to vector<16x56xi32>
    %5 = arith.sitofp %4 : vector<16x56xi32> to vector<16x56xf32>
    %c0_1 = arith.constant 0 : index
    %c0_2 = arith.constant 0 : index
    %6 = vector.load %arg2[%c0_1, %c0_2] : memref<808x128xf32, #tpu.memory_space<vmem>>, vector<56x32xf32>
    %cst = arith.constant dense<0.000000e+00> : vector<16x32xf32>
    %7 = tpu.matmul %5, %6, %cst {dimension_numbers = #tpu.dot_dimension_numbers<[1], [0], [0], [1], [0, 0, 1, 1], [], []>} : vector<16x56xf32>, vector<56x32xf32>, vector<16x32xf32> -> vector<16x32xf32>
    %c56 = arith.constant 56 : index
    %c0_3 = arith.constant 0 : index
    %8 = vector.load %arg2[%c56, %c0_3] : memref<808x128xf32, #tpu.memory_space<vmem>>, vector<16x32xf32>
    %9 = arith.addf %7, %8 : vector<16x32xf32>
    %c72 = arith.constant 72 : index
    %c0_4 = arith.constant 0 : index
    %10 = vector.load %arg2[%c72, %c0_4] : memref<808x128xf32, #tpu.memory_space<vmem>>, vector<16x64xf32>
    %c88 = arith.constant 88 : index
    %c0_5 = arith.constant 0 : index
    %11 = vector.load %arg2[%c88, %c0_5] : memref<808x128xf32, #tpu.memory_space<vmem>>, vector<64x64xf32>
    %c152 = arith.constant 152 : index
    %c0_6 = arith.constant 0 : index
    %12 = vector.load %arg2[%c152, %c0_6] : memref<808x128xf32, #tpu.memory_space<vmem>>, vector<64x64xf32>
    %c216 = arith.constant 216 : index
    %c0_7 = arith.constant 0 : index
    %13 = vector.load %arg2[%c216, %c0_7] : memref<808x128xf32, #tpu.memory_space<vmem>>, vector<64x16xf32>
    %c328 = arith.constant 328 : index
    %c0_8 = arith.constant 0 : index
    %14 = vector.load %arg2[%c328, %c0_8] : memref<808x128xf32, #tpu.memory_space<vmem>>, vector<32x64xf32>
    %c360 = arith.constant 360 : index
    %c0_9 = arith.constant 0 : index
    %15 = vector.load %arg2[%c360, %c0_9] : memref<808x128xf32, #tpu.memory_space<vmem>>, vector<32x64xf32>
    %c392 = arith.constant 392 : index
    %c0_10 = arith.constant 0 : index
    %16 = vector.load %arg2[%c392, %c0_10] : memref<808x128xf32, #tpu.memory_space<vmem>>, vector<64x32xf32>
    %c456 = arith.constant 456 : index
    %c0_11 = arith.constant 0 : index
    %17 = vector.load %arg2[%c456, %c0_11] : memref<808x128xf32, #tpu.memory_space<vmem>>, vector<32x64xf32>
    %c488 = arith.constant 488 : index
    %c0_12 = arith.constant 0 : index
    %18 = vector.load %arg2[%c488, %c0_12] : memref<808x128xf32, #tpu.memory_space<vmem>>, vector<64x32xf32>
    %c552 = arith.constant 552 : index
    %c0_13 = arith.constant 0 : index
    %19 = vector.load %arg2[%c552, %c0_13] : memref<808x128xf32, #tpu.memory_space<vmem>>, vector<9x128xf32>
    %20 = vector.extract_strided_slice %19 {offsets = [0, 0], sizes = [1, 32], strides = [1, 1]} : vector<9x128xf32> to vector<1x32xf32>
    %21 = vector.extract_strided_slice %19 {offsets = [1, 0], sizes = [1, 32], strides = [1, 1]} : vector<9x128xf32> to vector<1x32xf32>
    %22 = vector.extract_strided_slice %19 {offsets = [2, 0], sizes = [1, 32], strides = [1, 1]} : vector<9x128xf32> to vector<1x32xf32>
    %23 = vector.extract_strided_slice %19 {offsets = [3, 0], sizes = [1, 32], strides = [1, 1]} : vector<9x128xf32> to vector<1x32xf32>
    %24 = vector.extract_strided_slice %19 {offsets = [4, 0], sizes = [1, 64], strides = [1, 1]} : vector<9x128xf32> to vector<1x64xf32>
    %25 = vector.extract_strided_slice %19 {offsets = [5, 0], sizes = [1, 64], strides = [1, 1]} : vector<9x128xf32> to vector<1x64xf32>
    %26 = vector.extract_strided_slice %19 {offsets = [6, 0], sizes = [1, 32], strides = [1, 1]} : vector<9x128xf32> to vector<1x32xf32>
    %27 = vector.extract_strided_slice %19 {offsets = [7, 0], sizes = [1, 64], strides = [1, 1]} : vector<9x128xf32> to vector<1x64xf32>
    %28 = vector.extract_strided_slice %19 {offsets = [8, 0], sizes = [1, 32], strides = [1, 1]} : vector<9x128xf32> to vector<1x32xf32>
    %cst_14 = arith.constant dense<0.000000e+00> : vector<16xf32>
    %29 = vector.multi_reduction <add>, %9, %cst_14 [1] : vector<16x32xf32> to vector<16xf32>
    %30 = vector.shape_cast %29 : vector<16xf32> to vector<16x1xf32>
    %cst_15 = arith.constant 3.200000e+01 : f32
    %31 = vector.broadcast %cst_15 : f32 to vector<16x1xf32>
    %32 = arith.divf %30, %31 : vector<16x1xf32>
    %33 = arith.mulf %9, %9 : vector<16x32xf32>
    %cst_16 = arith.constant dense<0.000000e+00> : vector<16xf32>
    %34 = vector.multi_reduction <add>, %33, %cst_16 [1] : vector<16x32xf32> to vector<16xf32>
    %35 = vector.shape_cast %34 : vector<16xf32> to vector<16x1xf32>
    %cst_17 = arith.constant 3.200000e+01 : f32
    %36 = vector.broadcast %cst_17 : f32 to vector<16x1xf32>
    %37 = arith.divf %35, %36 : vector<16x1xf32>
    %38 = arith.mulf %32, %32 : vector<16x1xf32>
    %39 = arith.subf %37, %38 : vector<16x1xf32>
    %40 = vector.broadcast %32 : vector<16x1xf32> to vector<16x32xf32>
    %41 = arith.subf %9, %40 : vector<16x32xf32>
    %cst_18 = arith.constant 9.99999996E-13 : f32
    %42 = vector.broadcast %cst_18 : f32 to vector<16x1xf32>
    %43 = arith.addf %39, %42 : vector<16x1xf32>
    %44 = math.rsqrt %43 : vector<16x1xf32>
    %45 = vector.broadcast %44 : vector<16x1xf32> to vector<16x32xf32>
    %46 = arith.mulf %41, %45 : vector<16x32xf32>
    %47 = vector.broadcast %20 : vector<1x32xf32> to vector<16x32xf32>
    %48 = arith.mulf %46, %47 : vector<16x32xf32>
    %49 = vector.broadcast %21 : vector<1x32xf32> to vector<16x32xf32>
    %50 = arith.addf %48, %49 : vector<16x32xf32>
    %cst_19 = arith.constant dense<0.000000e+00> : vector<16x64xf32>
    %51 = tpu.matmul %50, %14, %cst_19 {dimension_numbers = #tpu.dot_dimension_numbers<[1], [0], [0], [1], [0, 0, 1, 1], [], []>} : vector<16x32xf32>, vector<32x64xf32>, vector<16x64xf32> -> vector<16x64xf32>
    %52 = vector.broadcast %24 : vector<1x64xf32> to vector<16x64xf32>
    %53 = arith.addf %51, %52 : vector<16x64xf32>
    %cst_20 = arith.constant dense<0.000000e+00> : vector<16x64xf32>
    %54 = tpu.matmul %50, %15, %cst_20 {dimension_numbers = #tpu.dot_dimension_numbers<[1], [0], [0], [1], [0, 0, 1, 1], [], []>} : vector<16x32xf32>, vector<32x64xf32>, vector<16x64xf32> -> vector<16x64xf32>
    %55 = vector.broadcast %25 : vector<1x64xf32> to vector<16x64xf32>
    %56 = arith.addf %54, %55 : vector<16x64xf32>
    %cst_21 = arith.constant dense<0.000000e+00> : vector<64x64xf32>
    %57 = tpu.matmul %13, %56, %cst_21 {dimension_numbers = #tpu.dot_dimension_numbers<[1], [0], [0], [1], [0, 0, 1, 1], [], []>} : vector<64x16xf32>, vector<16x64xf32>, vector<64x64xf32> -> vector<64x64xf32>
    %58 = arith.mulf %57, %11 : vector<64x64xf32>
    "tpu.trace_start"() <{level = 10 : i32, message = "nd,md->nm"}> : () -> ()
    %cst_22 = arith.constant dense<0.000000e+00> : vector<16x64xf32>
    %59 = tpu.matmul %53, %58, %cst_22 {dimension_numbers = #tpu.dot_dimension_numbers<[1], [1], [0], [0], [0, 0, 1, 0], [], []>} : vector<16x64xf32>, vector<64x64xf32>, vector<16x64xf32> -> vector<16x64xf32>
    "tpu.trace_stop"() : () -> ()
    %60 = arith.addf %59, %10 : vector<16x64xf32>
    %cst_23 = arith.constant dense<0xFF800000> : vector<16xf32>
    %61 = vector.multi_reduction <maximumf>, %60, %cst_23 [1] : vector<16x64xf32> to vector<16xf32>
    %62 = vector.shape_cast %61 : vector<16xf32> to vector<16x1xf32>
    %63 = vector.broadcast %62 : vector<16x1xf32> to vector<16x64xf32>
    %64 = arith.subf %60, %63 : vector<16x64xf32>
    %65 = math.exp %64 : vector<16x64xf32>
    %cst_24 = arith.constant dense<0.000000e+00> : vector<16x64xf32>
    %66 = tpu.matmul %65, %12, %cst_24 {dimension_numbers = #tpu.dot_dimension_numbers<[1], [0], [0], [1], [0, 0, 1, 1], [], []>} : vector<16x64xf32>, vector<64x64xf32>, vector<16x64xf32> -> vector<16x64xf32>
    %67 = tpu.reciprocal %66 {approx = true} : vector<16x64xf32> -> vector<16x64xf32>
    %68 = arith.mulf %65, %67 : vector<16x64xf32>
    %cst_25 = arith.constant dense<0.000000e+00> : vector<16x64xf32>
    %69 = tpu.matmul %68, %58, %cst_25 {dimension_numbers = #tpu.dot_dimension_numbers<[1], [0], [0], [1], [0, 0, 1, 1], [], []>} : vector<16x64xf32>, vector<64x64xf32>, vector<16x64xf32> -> vector<16x64xf32>
    %cst_26 = arith.constant dense<0.000000e+00> : vector<16x32xf32>
    %70 = tpu.matmul %69, %16, %cst_26 {dimension_numbers = #tpu.dot_dimension_numbers<[1], [0], [0], [1], [0, 0, 1, 1], [], []>} : vector<16x64xf32>, vector<64x32xf32>, vector<16x32xf32> -> vector<16x32xf32>
    %71 = vector.broadcast %26 : vector<1x32xf32> to vector<16x32xf32>
    %72 = arith.addf %70, %71 : vector<16x32xf32>
    %73 = arith.addf %72, %50 : vector<16x32xf32>
    %cst_27 = arith.constant dense<0.000000e+00> : vector<16xf32>
    %74 = vector.multi_reduction <add>, %73, %cst_27 [1] : vector<16x32xf32> to vector<16xf32>
    %75 = vector.shape_cast %74 : vector<16xf32> to vector<16x1xf32>
    %cst_28 = arith.constant 3.200000e+01 : f32
    %76 = vector.broadcast %cst_28 : f32 to vector<16x1xf32>
    %77 = arith.divf %75, %76 : vector<16x1xf32>
    %78 = arith.mulf %73, %73 : vector<16x32xf32>
    %cst_29 = arith.constant dense<0.000000e+00> : vector<16xf32>
    %79 = vector.multi_reduction <add>, %78, %cst_29 [1] : vector<16x32xf32> to vector<16xf32>
    %80 = vector.shape_cast %79 : vector<16xf32> to vector<16x1xf32>
    %cst_30 = arith.constant 3.200000e+01 : f32
    %81 = vector.broadcast %cst_30 : f32 to vector<16x1xf32>
    %82 = arith.divf %80, %81 : vector<16x1xf32>
    %83 = arith.mulf %77, %77 : vector<16x1xf32>
    %84 = arith.subf %82, %83 : vector<16x1xf32>
    %85 = vector.broadcast %77 : vector<16x1xf32> to vector<16x32xf32>
    %86 = arith.subf %73, %85 : vector<16x32xf32>
    %cst_31 = arith.constant 9.99999996E-13 : f32
    %87 = vector.broadcast %cst_31 : f32 to vector<16x1xf32>
    %88 = arith.addf %84, %87 : vector<16x1xf32>
    %89 = math.rsqrt %88 : vector<16x1xf32>
    %90 = vector.broadcast %89 : vector<16x1xf32> to vector<16x32xf32>
    %91 = arith.mulf %86, %90 : vector<16x32xf32>
    %92 = vector.broadcast %22 : vector<1x32xf32> to vector<16x32xf32>
    %93 = arith.mulf %91, %92 : vector<16x32xf32>
    %94 = vector.broadcast %23 : vector<1x32xf32> to vector<16x32xf32>
    %95 = arith.addf %93, %94 : vector<16x32xf32>
    %cst_32 = arith.constant dense<0.000000e+00> : vector<16x64xf32>
    %96 = tpu.matmul %95, %17, %cst_32 {dimension_numbers = #tpu.dot_dimension_numbers<[1], [0], [0], [1], [0, 0, 1, 1], [], []>} : vector<16x32xf32>, vector<32x64xf32>, vector<16x64xf32> -> vector<16x64xf32>
    %97 = vector.broadcast %27 : vector<1x64xf32> to vector<16x64xf32>
    %98 = arith.addf %96, %97 : vector<16x64xf32>
    %cst_33 = arith.constant 0.000000e+00 : f32
    %99 = vector.broadcast %cst_33 : f32 to vector<16x64xf32>
    %100 = arith.maximumf %98, %99 : vector<16x64xf32>
    %cst_34 = arith.constant dense<0.000000e+00> : vector<16x32xf32>
    %101 = tpu.matmul %100, %18, %cst_34 {dimension_numbers = #tpu.dot_dimension_numbers<[1], [0], [0], [1], [0, 0, 1, 1], [], []>} : vector<16x64xf32>, vector<64x32xf32>, vector<16x32xf32> -> vector<16x32xf32>
    %102 = vector.broadcast %28 : vector<1x32xf32> to vector<16x32xf32>
    %103 = arith.addf %101, %102 : vector<16x32xf32>
    %104 = arith.addf %103, %95 : vector<16x32xf32>
    %c568 = arith.constant 568 : index
    %c0_35 = arith.constant 0 : index
    %105 = vector.load %arg2[%c568, %c0_35] : memref<808x128xf32, #tpu.memory_space<vmem>>, vector<32x64xf32>
    %c600 = arith.constant 600 : index
    %c0_36 = arith.constant 0 : index
    %106 = vector.load %arg2[%c600, %c0_36] : memref<808x128xf32, #tpu.memory_space<vmem>>, vector<32x64xf32>
    %c632 = arith.constant 632 : index
    %c0_37 = arith.constant 0 : index
    %107 = vector.load %arg2[%c632, %c0_37] : memref<808x128xf32, #tpu.memory_space<vmem>>, vector<64x32xf32>
    %c696 = arith.constant 696 : index
    %c0_38 = arith.constant 0 : index
    %108 = vector.load %arg2[%c696, %c0_38] : memref<808x128xf32, #tpu.memory_space<vmem>>, vector<32x64xf32>
    %c728 = arith.constant 728 : index
    %c0_39 = arith.constant 0 : index
    %109 = vector.load %arg2[%c728, %c0_39] : memref<808x128xf32, #tpu.memory_space<vmem>>, vector<64x32xf32>
    %c792 = arith.constant 792 : index
    %c0_40 = arith.constant 0 : index
    %110 = vector.load %arg2[%c792, %c0_40] : memref<808x128xf32, #tpu.memory_space<vmem>>, vector<9x128xf32>
    %111 = vector.extract_strided_slice %110 {offsets = [0, 0], sizes = [1, 32], strides = [1, 1]} : vector<9x128xf32> to vector<1x32xf32>
    %112 = vector.extract_strided_slice %110 {offsets = [1, 0], sizes = [1, 32], strides = [1, 1]} : vector<9x128xf32> to vector<1x32xf32>
    %113 = vector.extract_strided_slice %110 {offsets = [2, 0], sizes = [1, 32], strides = [1, 1]} : vector<9x128xf32> to vector<1x32xf32>
    %114 = vector.extract_strided_slice %110 {offsets = [3, 0], sizes = [1, 32], strides = [1, 1]} : vector<9x128xf32> to vector<1x32xf32>
    %115 = vector.extract_strided_slice %110 {offsets = [4, 0], sizes = [1, 64], strides = [1, 1]} : vector<9x128xf32> to vector<1x64xf32>
    %116 = vector.extract_strided_slice %110 {offsets = [5, 0], sizes = [1, 64], strides = [1, 1]} : vector<9x128xf32> to vector<1x64xf32>
    %117 = vector.extract_strided_slice %110 {offsets = [6, 0], sizes = [1, 32], strides = [1, 1]} : vector<9x128xf32> to vector<1x32xf32>
    %118 = vector.extract_strided_slice %110 {offsets = [7, 0], sizes = [1, 64], strides = [1, 1]} : vector<9x128xf32> to vector<1x64xf32>
    %119 = vector.extract_strided_slice %110 {offsets = [8, 0], sizes = [1, 32], strides = [1, 1]} : vector<9x128xf32> to vector<1x32xf32>
    %cst_41 = arith.constant dense<0.000000e+00> : vector<16xf32>
    %120 = vector.multi_reduction <add>, %104, %cst_41 [1] : vector<16x32xf32> to vector<16xf32>
    %121 = vector.shape_cast %120 : vector<16xf32> to vector<16x1xf32>
    %cst_42 = arith.constant 3.200000e+01 : f32
    %122 = vector.broadcast %cst_42 : f32 to vector<16x1xf32>
    %123 = arith.divf %121, %122 : vector<16x1xf32>
    %124 = arith.mulf %104, %104 : vector<16x32xf32>
    %cst_43 = arith.constant dense<0.000000e+00> : vector<16xf32>
    %125 = vector.multi_reduction <add>, %124, %cst_43 [1] : vector<16x32xf32> to vector<16xf32>
    %126 = vector.shape_cast %125 : vector<16xf32> to vector<16x1xf32>
    %cst_44 = arith.constant 3.200000e+01 : f32
    %127 = vector.broadcast %cst_44 : f32 to vector<16x1xf32>
    %128 = arith.divf %126, %127 : vector<16x1xf32>
    %129 = arith.mulf %123, %123 : vector<16x1xf32>
    %130 = arith.subf %128, %129 : vector<16x1xf32>
    %131 = vector.broadcast %123 : vector<16x1xf32> to vector<16x32xf32>
    %132 = arith.subf %104, %131 : vector<16x32xf32>
    %cst_45 = arith.constant 9.99999996E-13 : f32
    %133 = vector.broadcast %cst_45 : f32 to vector<16x1xf32>
    %134 = arith.addf %130, %133 : vector<16x1xf32>
    %135 = math.rsqrt %134 : vector<16x1xf32>
    %136 = vector.broadcast %135 : vector<16x1xf32> to vector<16x32xf32>
    %137 = arith.mulf %132, %136 : vector<16x32xf32>
    %138 = vector.broadcast %111 : vector<1x32xf32> to vector<16x32xf32>
    %139 = arith.mulf %137, %138 : vector<16x32xf32>
    %140 = vector.broadcast %112 : vector<1x32xf32> to vector<16x32xf32>
    %141 = arith.addf %139, %140 : vector<16x32xf32>
    %cst_46 = arith.constant dense<0.000000e+00> : vector<16x64xf32>
    %142 = tpu.matmul %141, %105, %cst_46 {dimension_numbers = #tpu.dot_dimension_numbers<[1], [0], [0], [1], [0, 0, 1, 1], [], []>} : vector<16x32xf32>, vector<32x64xf32>, vector<16x64xf32> -> vector<16x64xf32>
    %143 = vector.broadcast %115 : vector<1x64xf32> to vector<16x64xf32>
    %144 = arith.addf %142, %143 : vector<16x64xf32>
    %cst_47 = arith.constant dense<0.000000e+00> : vector<16x64xf32>
    %145 = tpu.matmul %141, %106, %cst_47 {dimension_numbers = #tpu.dot_dimension_numbers<[1], [0], [0], [1], [0, 0, 1, 1], [], []>} : vector<16x32xf32>, vector<32x64xf32>, vector<16x64xf32> -> vector<16x64xf32>
    %146 = vector.broadcast %116 : vector<1x64xf32> to vector<16x64xf32>
    %147 = arith.addf %145, %146 : vector<16x64xf32>
    %cst_48 = arith.constant dense<0.000000e+00> : vector<64x64xf32>
    %148 = tpu.matmul %13, %147, %cst_48 {dimension_numbers = #tpu.dot_dimension_numbers<[1], [0], [0], [1], [0, 0, 1, 1], [], []>} : vector<64x16xf32>, vector<16x64xf32>, vector<64x64xf32> -> vector<64x64xf32>
    %149 = arith.mulf %148, %11 : vector<64x64xf32>
    "tpu.trace_start"() <{level = 10 : i32, message = "nd,md->nm"}> : () -> ()
    %cst_49 = arith.constant dense<0.000000e+00> : vector<16x64xf32>
    %150 = tpu.matmul %144, %149, %cst_49 {dimension_numbers = #tpu.dot_dimension_numbers<[1], [1], [0], [0], [0, 0, 1, 0], [], []>} : vector<16x64xf32>, vector<64x64xf32>, vector<16x64xf32> -> vector<16x64xf32>
    "tpu.trace_stop"() : () -> ()
    %151 = arith.addf %150, %10 : vector<16x64xf32>
    %cst_50 = arith.constant dense<0xFF800000> : vector<16xf32>
    %152 = vector.multi_reduction <maximumf>, %151, %cst_50 [1] : vector<16x64xf32> to vector<16xf32>
    %153 = vector.shape_cast %152 : vector<16xf32> to vector<16x1xf32>
    %154 = vector.broadcast %153 : vector<16x1xf32> to vector<16x64xf32>
    %155 = arith.subf %151, %154 : vector<16x64xf32>
    %156 = math.exp %155 : vector<16x64xf32>
    %cst_51 = arith.constant dense<0.000000e+00> : vector<16x64xf32>
    %157 = tpu.matmul %156, %12, %cst_51 {dimension_numbers = #tpu.dot_dimension_numbers<[1], [0], [0], [1], [0, 0, 1, 1], [], []>} : vector<16x64xf32>, vector<64x64xf32>, vector<16x64xf32> -> vector<16x64xf32>
    %158 = tpu.reciprocal %157 {approx = true} : vector<16x64xf32> -> vector<16x64xf32>
    %159 = arith.mulf %156, %158 : vector<16x64xf32>
    %cst_52 = arith.constant dense<0.000000e+00> : vector<16x64xf32>
    %160 = tpu.matmul %159, %149, %cst_52 {dimension_numbers = #tpu.dot_dimension_numbers<[1], [0], [0], [1], [0, 0, 1, 1], [], []>} : vector<16x64xf32>, vector<64x64xf32>, vector<16x64xf32> -> vector<16x64xf32>
    %cst_53 = arith.constant dense<0.000000e+00> : vector<16x32xf32>
    %161 = tpu.matmul %160, %107, %cst_53 {dimension_numbers = #tpu.dot_dimension_numbers<[1], [0], [0], [1], [0, 0, 1, 1], [], []>} : vector<16x64xf32>, vector<64x32xf32>, vector<16x32xf32> -> vector<16x32xf32>
    %162 = vector.broadcast %117 : vector<1x32xf32> to vector<16x32xf32>
    %163 = arith.addf %161, %162 : vector<16x32xf32>
    %164 = arith.addf %163, %141 : vector<16x32xf32>
    %cst_54 = arith.constant dense<0.000000e+00> : vector<16xf32>
    %165 = vector.multi_reduction <add>, %164, %cst_54 [1] : vector<16x32xf32> to vector<16xf32>
    %166 = vector.shape_cast %165 : vector<16xf32> to vector<16x1xf32>
    %cst_55 = arith.constant 3.200000e+01 : f32
    %167 = vector.broadcast %cst_55 : f32 to vector<16x1xf32>
    %168 = arith.divf %166, %167 : vector<16x1xf32>
    %169 = arith.mulf %164, %164 : vector<16x32xf32>
    %cst_56 = arith.constant dense<0.000000e+00> : vector<16xf32>
    %170 = vector.multi_reduction <add>, %169, %cst_56 [1] : vector<16x32xf32> to vector<16xf32>
    %171 = vector.shape_cast %170 : vector<16xf32> to vector<16x1xf32>
    %cst_57 = arith.constant 3.200000e+01 : f32
    %172 = vector.broadcast %cst_57 : f32 to vector<16x1xf32>
    %173 = arith.divf %171, %172 : vector<16x1xf32>
    %174 = arith.mulf %168, %168 : vector<16x1xf32>
    %175 = arith.subf %173, %174 : vector<16x1xf32>
    %176 = vector.broadcast %168 : vector<16x1xf32> to vector<16x32xf32>
    %177 = arith.subf %164, %176 : vector<16x32xf32>
    %cst_58 = arith.constant 9.99999996E-13 : f32
    %178 = vector.broadcast %cst_58 : f32 to vector<16x1xf32>
    %179 = arith.addf %175, %178 : vector<16x1xf32>
    %180 = math.rsqrt %179 : vector<16x1xf32>
    %181 = vector.broadcast %180 : vector<16x1xf32> to vector<16x32xf32>
    %182 = arith.mulf %177, %181 : vector<16x32xf32>
    %183 = vector.broadcast %113 : vector<1x32xf32> to vector<16x32xf32>
    %184 = arith.mulf %182, %183 : vector<16x32xf32>
    %185 = vector.broadcast %114 : vector<1x32xf32> to vector<16x32xf32>
    %186 = arith.addf %184, %185 : vector<16x32xf32>
    %cst_59 = arith.constant dense<0.000000e+00> : vector<16x64xf32>
    %187 = tpu.matmul %186, %108, %cst_59 {dimension_numbers = #tpu.dot_dimension_numbers<[1], [0], [0], [1], [0, 0, 1, 1], [], []>} : vector<16x32xf32>, vector<32x64xf32>, vector<16x64xf32> -> vector<16x64xf32>
    %188 = vector.broadcast %118 : vector<1x64xf32> to vector<16x64xf32>
    %189 = arith.addf %187, %188 : vector<16x64xf32>
    %cst_60 = arith.constant 0.000000e+00 : f32
    %190 = vector.broadcast %cst_60 : f32 to vector<16x64xf32>
    %191 = arith.maximumf %189, %190 : vector<16x64xf32>
    %cst_61 = arith.constant dense<0.000000e+00> : vector<16x32xf32>
    %192 = tpu.matmul %191, %109, %cst_61 {dimension_numbers = #tpu.dot_dimension_numbers<[1], [0], [0], [1], [0, 0, 1, 1], [], []>} : vector<16x64xf32>, vector<64x32xf32>, vector<16x32xf32> -> vector<16x32xf32>
    %193 = vector.broadcast %119 : vector<1x32xf32> to vector<16x32xf32>
    %194 = arith.addf %192, %193 : vector<16x32xf32>
    %195 = arith.addf %194, %186 : vector<16x32xf32>
    %c0_62 = arith.constant 0 : index
    %c0_63 = arith.constant 0 : index
    %196 = vector.load %arg1[%c0_62, %c0_63] : memref<16x1xf32, #tpu.memory_space<vmem>>, vector<16x1xf32>
    %197 = vector.broadcast %196 : vector<16x1xf32> to vector<16x32xf32>
    %198 = arith.mulf %195, %197 : vector<16x32xf32>
    %c280 = arith.constant 280 : index
    %c0_64 = arith.constant 0 : index
    %199 = vector.load %arg2[%c280, %c0_64] : memref<808x128xf32, #tpu.memory_space<vmem>>, vector<2x16xf32>
    %cst_65 = arith.constant dense<0.000000e+00> : vector<2x32xf32>
    %200 = tpu.matmul %199, %198, %cst_65 {dimension_numbers = #tpu.dot_dimension_numbers<[1], [0], [0], [1], [0, 0, 1, 1], [], []>} : vector<2x16xf32>, vector<16x32xf32>, vector<2x32xf32> -> vector<2x32xf32>
    %c288 = arith.constant 288 : index
    %c0_66 = arith.constant 0 : index
    %201 = vector.load %arg2[%c288, %c0_66] : memref<808x128xf32, #tpu.memory_space<vmem>>, vector<33x128xf32>
    %202 = vector.extract_strided_slice %201 {offsets = [0, 0], sizes = [32, 128], strides = [1, 1]} : vector<33x128xf32> to vector<32x128xf32>
    %cst_67 = arith.constant dense<0.000000e+00> : vector<2x128xf32>
    %203 = tpu.matmul %200, %202, %cst_67 {dimension_numbers = #tpu.dot_dimension_numbers<[1], [0], [0], [1], [0, 0, 1, 1], [], []>} : vector<2x32xf32>, vector<32x128xf32>, vector<2x128xf32> -> vector<2x128xf32>
    %204 = vector.extract_strided_slice %201 {offsets = [32, 0], sizes = [1, 128], strides = [1, 1]} : vector<33x128xf32> to vector<1x128xf32>
    %205 = vector.broadcast %204 : vector<1x128xf32> to vector<2x128xf32>
    %206 = arith.addf %203, %205 : vector<2x128xf32>
    %c0_68 = arith.constant 0 : index
    %c0_69 = arith.constant 0 : index
    %207 = vector.load %arg3[%c0_68, %c0_69] : memref<2x128xf32, #tpu.memory_space<vmem>>, vector<2x128xf32>
    tpu.vector_store %arg3[%c0_68, %c0_69], %206 {strides = array<i32>} : memref<2x128xf32, #tpu.memory_space<vmem>>, vector<2x128xf32>,
    return
  }
}

</mosaic_0001>

<llo_original>
// kernel: forward_pallas.1
$region0: #{forward_pallas.1}
  #allocation0 [shape = 'u32[]', space=smem, size = 0x4, offset = 0x4, fixed_abs, tag = 'smem constant byte address 0x4 - core index']
  #allocation1 [shape = 'u32[72,128]{1,0:T(1,128)}', space=vmem, size = 0x9000, scoped, tag = 'internal scratch']
  %s0 = inlined_call_operand.vmem [shape: s32[16,1], index: 0, kind: input, shape index: {}]
  %s1 = inlined_call_operand.vmem [shape: f32[16,1], index: 1, kind: input, shape index: {}]
  %s2 = inlined_call_operand.hbm [shape: f32[808,128], index: 2, kind: input, shape index: {}]
  %s3 = inlined_call_operand.hbm [shape: f32[2,128], index: 3, kind: output, shape index: {}]
  %s4 = sld [smem:[#allocation0]]
  $region26: #{forward_pallas.1} parent=0
    _
  %s6 = ssub.s32 1, %s4
  %s7 = scalar_select 0, %s6, %s4
  $region1: #{forward_pallas.1} parent=0
    #allocation2 [shape = 'u8[413696]{0}', space=vmem, size = 0x65000, scoped, tag = 'input window, operand 2, single buffered']
    #allocation3 [shape = 's32[1]{0}', space=sflag, size = 0x4, scoped, tag = 'scoped memory for forward_pallas.1']
    #allocation4 [shape = 's32[1]{0}', space=sflag, size = 0x4, scoped, tag = 'scoped memory for forward_pallas.1']
    #allocation5 [shape = 'u8[1024]{0}', space=vmem, size = 0x400, scoped, tag = 'output window, operand 0, single buffered']
    %8 = vsyncpa [#allocation3], 0
    %9 = vsyncpa [#allocation4], 0
    // Predicated region
    $region2: #{forward_pallas.1} parent=1 // pred_check
      _
    $region3: #{forward_pallas.1} parent=1 // pred_check_branch
      %11 = sbr.rel (0) target = $region5
    $region4: #{forward_pallas.1} parent=1 // pred_region
      _
    $region5: #{forward_pallas.1} parent=1 // pred_fallthru
      _
    // Predicated region
    $region6: #{forward_pallas.1} parent=1 // pred_check
      _
    $region7: #{forward_pallas.1} parent=1 // pred_check_branch
      %13 = sbr.rel (0) target = $region9
    $region8: #{forward_pallas.1} parent=1 // pred_region
      _
    $region9: #{forward_pallas.1} parent=1 // pred_fallthru
      _
    // Predicated region
    $region10: #{forward_pallas.1} parent=1 // pred_check
      _
    $region11: #{forward_pallas.1} parent=1 // pred_check_branch
      %15 = sbr.rel (0) target = $region13
    $region12: #{forward_pallas.1} parent=1 // pred_region
      %17 = vsyncadd [#allocation3], 0
      %s18 = sshll.u32 %s2, 4
      %s19 = int_to_ptr.hbm [resolvable:$true] %s18
      %s20 = sshll.u32 [#allocation2], 4
      %s21 = int_to_ptr.vmem [resolvable:$true] %s20
      %26 = dma.hbm_to_vmem [thread:$0]  %s19, 12928, %s21, [#allocation3], 128, 128, 8
    $region13: #{forward_pallas.1} parent=1 // pred_fallthru
      _
    // Predicated region
    $region14: #{forward_pallas.1} parent=1 // pred_check
      _
    $region15: #{forward_pallas.1} parent=1 // pred_check_branch
      %28 = sbr.rel (0) target = $region17
    $region16: #{forward_pallas.1} parent=1 // pred_region
      %30 = dma.done [#allocation3], 12928
    $region17: #{forward_pallas.1} parent=1 // pred_fallthru
      _
    %v31 = vld [vmem:[%s0] sm:$0xff]
    %v32 = vld [vmem:[%s0 + $0x8] sm:$0xff]
    %v33 = vlaneseq
    %v34 = vand.u32 %v33, 127
    %35 = vset.pattern.permute.xlu0 0
    %36 = vperm.xlu0 %35, %v31
    %v37 = vpop.permute.xlu0 %36
    %38 = vset.pattern.permute.xlu0 0
    %39 = vperm.xlu0 %38, %v32
    %v40 = vpop.permute.xlu0 %39
    %vm41 = vcmp.eq.s32.totalorder %v37, %v34
    %vm42 = vcmp.eq.s32.totalorder %v40, %v34
    %v43 = vsel %vm41, 1, 0
    %v44 = vsel %vm42, 1, 0
    %v45 = vcvt.s32.f32 %v43
    %v46 = vcvt.s32.f32 %v44
    %v47 = vld [vmem:[#allocation2] sm:$0xff]
    %v48 = vld [vmem:[#allocation2 + $0x8] sm:$0xff]
    %v49 = vld [vmem:[#allocation2 + $0x10] sm:$0xff]
    %v50 = vld [vmem:[#allocation2 + $0x18] sm:$0xff]
    %v51 = vld [vmem:[#allocation2 + $0x20] sm:$0xff]
    %v52 = vld [vmem:[#allocation2 + $0x28] sm:$0xff]
    %v53 = vld [vmem:[#allocation2 + $0x30] sm:$0xff]
    %v54 = vld [vmem:[#allocation2 + $0x38] sm:$0xff]
    %v55 = vld [vmem:[#allocation2 + $0x40] sm:$0xff]
    %vm56 = vcmask 457728
    %v58 = vsel %vm56, %v45, 0
    %v61 = vsel %vm56, %v46, 0
    %63 = vmatpush.msra.mxu0 0.0
    %64 = vmatpush.msra.mxu0 0.0
    %65 = vmatpush.msra.mxu0 0.0
    %66 = vmatpush.msra.mxu0 0.0
    %67 = vmatpush.msra.mxu0 0.0
    %68 = vmatpush.msra.mxu0 0.0
    %69 = vmatpush.msra.mxu0 0.0
    %70 = vmatpush.msra.mxu0 0.0
    %71 = vmatpush.msra.mxu0 0.0
    %72 = vmatpush.msra.mxu0 %v53
    %73 = vmatpush.msra.mxu0 %v52
    %74 = vmatpush.msra.mxu0 %v51
    %75 = vmatpush.msra.mxu0 %v50
    %76 = vmatpush.msra.mxu0 %v49
    %77 = vmatpush.msra.mxu0 %v48
    %78 = vmatpush.msra.mxu0 %v47
    %79 = vmatmul.f32.gmra.mxu0 %v58
    %v80 = vpop.f32.mrf.mxu0
    %v81 = vadd.f32 %v54, %v80
    %82 = vmatmul.f32.gmra.mxu0 %v61
    %v83 = vpop.f32.mrf.mxu0
    %v84 = vadd.f32 %v55, %v83
    %85 = vdwg.mxu0
    %v86 = vld [vmem:[#allocation2 + $0x48] sm:$0xff]
    %v87 = vld [vmem:[#allocation2 + $0x50] sm:$0xff]
    %v88 = vld [vmem:[#allocation2 + $0x58] sm:$0xff]
    %v89 = vld [vmem:[#allocation2 + $0x60] sm:$0xff]
    %v90 = vld [vmem:[#allocation2 + $0x68] sm:$0xff]
    %v91 = vld [vmem:[#allocation2 + $0x70] sm:$0xff]
    %v92 = vld [vmem:[#allocation2 + $0x78] sm:$0xff]
    %v93 = vld [vmem:[#allocation2 + $0x80] sm:$0xff]
    %v94 = vld [vmem:[#allocation2 + $0x88] sm:$0xff]
    %v95 = vld [vmem:[#allocation2 + $0x90] sm:$0xff]
    %v96 = vld [vmem:[#allocation2 + $0x98] sm:$0xff]
    %v97 = vld [vmem:[#allocation2 + $0xa0] sm:$0xff]
    %v98 = vld [vmem:[#allocation2 + $0xa8] sm:$0xff]
    %v99 = vld [vmem:[#allocation2 + $0xb0] sm:$0xff]
    %v100 = vld [vmem:[#allocation2 + $0xb8] sm:$0xff]
    %v101 = vld [vmem:[#allocation2 + $0xc0] sm:$0xff]
    %v102 = vld [vmem:[#allocation2 + $0xc8] sm:$0xff]
    %v103 = vld [vmem:[#allocation2 + $0xd0] sm:$0xff]
    %v104 = vld [vmem:[#allocation2 + $0xd8] sm:$0xff]
    %v105 = vld [vmem:[#allocation2 + $0xe0] sm:$0xff]
    %v106 = vld [vmem:[#allocation2 + $0xe8] sm:$0xff]
    %v107 = vld [vmem:[#allocation2 + $0xf0] sm:$0xff]
    %v108 = vld [vmem:[#allocation2 + $0xf8] sm:$0xff]
    %v109 = vld [vmem:[#allocation2 + $0x100] sm:$0xff]
    %v110 = vld [vmem:[#allocation2 + $0x108] sm:$0xff]
    %v111 = vld [vmem:[#allocation2 + $0x110] sm:$0xff]
    %v112 = vld [vmem:[#allocation2 + $0x148] sm:$0xff]
    %v113 = vld [vmem:[#allocation2 + $0x150] sm:$0xff]
    %v114 = vld [vmem:[#allocation2 + $0x158] sm:$0xff]
    %v115 = vld [vmem:[#allocation2 + $0x160] sm:$0xff]
    %v116 = vld [vmem:[#allocation2 + $0x168] sm:$0xff]
    %v117 = vld [vmem:[#allocation2 + $0x170] sm:$0xff]
    %v118 = vld [vmem:[#allocation2 + $0x178] sm:$0xff]
    %v119 = vld [vmem:[#allocation2 + $0x180] sm:$0xff]
    %v120 = vld [vmem:[#allocation2 + $0x188] sm:$0xff]
    %v121 = vld [vmem:[#allocation2 + $0x190] sm:$0xff]
    %v122 = vld [vmem:[#allocation2 + $0x198] sm:$0xff]
    %v123 = vld [vmem:[#allocation2 + $0x1a0] sm:$0xff]
    %v124 = vld [vmem:[#allocation2 + $0x1a8] sm:$0xff]
    %v125 = vld [vmem:[#allocation2 + $0x1b0] sm:$0xff]
    %v126 = vld [vmem:[#allocation2 + $0x1b8] sm:$0xff]
    %v127 = vld [vmem:[#allocation2 + $0x1c0] sm:$0xff]
    %v128 = vld [vmem:[#allocation2 + $0x1c8] sm:$0xff]
    %v129 = vld [vmem:[#allocation2 + $0x1d0] sm:$0xff]
    %v130 = vld [vmem:[#allocation2 + $0x1d8] sm:$0xff]
    %v131 = vld [vmem:[#allocation2 + $0x1e0] sm:$0xff]
    %v132 = vld [vmem:[#allocation2 + $0x1e8] sm:$0xff]
    %v133 = vld [vmem:[#allocation2 + $0x1f0] sm:$0xff]
    %v134 = vld [vmem:[#allocation2 + $0x1f8] sm:$0xff]
    %v135 = vld [vmem:[#allocation2 + $0x200] sm:$0xff]
    %v136 = vld [vmem:[#allocation2 + $0x208] sm:$0xff]
    %v137 = vld [vmem:[#allocation2 + $0x210] sm:$0xff]
    %v138 = vld [vmem:[#allocation2 + $0x218] sm:$0xff]
    %v139 = vld [vmem:[#allocation2 + $0x220] sm:$0xff]
    %v140 = vld [vmem:[#allocation2 + $0x228] sm:$0xff]
    %v141 = vld [vmem:[#allocation2 + $0x230] sm:$0x1]
    %vm142 = vcmask 261120
    %v143 = vsel %vm142, %v81, 0.0
    %144 = vadd.xlane.f32.xlu0 %v143
    %v145 = vpop.xlane.xlu0 %144
    %v146 = vsel %vm142, %v84, 0.0
    %147 = vadd.xlane.f32.xlu0 %v146
    %v148 = vpop.xlane.xlu0 %147
    %v149 = vrcp.pop 32.0
    %v150 = vmul.f32 32.0, %v149
    %v151 = vsub.f32 1.0, %v150
    %v152 = vmul.f32 %v149, %v151
    %v153 = vadd.f32 %v149, %v152
    %vm154 = vweird.f32 %v149
    %v155 = vsel %vm154, %v149, %v153
    %v156 = vmul.f32 %v145, %v155
    %v157 = vmul.f32 %v148, %v155
    %v158 = vmul.f32 %v81, %v81
    %v159 = vmul.f32 %v84, %v84
    %v160 = vsel %vm142, %v158, 0.0
    %161 = vadd.xlane.f32.xlu0 %v160
    %v162 = vpop.xlane.xlu0 %161
    %v163 = vsel %vm142, %v159, 0.0
    %164 = vadd.xlane.f32.xlu0 %v163
    %v165 = vpop.xlane.xlu0 %164
    %v166 = vmul.f32 %v162, %v155
    %v167 = vmul.f32 %v165, %v155
    %v168 = vmul.f32 %v156, %v156
    %v169 = vmul.f32 %v157, %v157
    %v170 = vsub.f32 %v166, %v168
    %v171 = vsub.f32 %v167, %v169
    %v172 = vsub.f32 %v81, %v156
    %v173 = vsub.f32 %v84, %v157
    %v174 = vadd.f32 %v170, 1e-12
    %v175 = vadd.f32 %v171, 1e-12
    %v176 = vrsqrt.pop %v174
    %v177 = vmul.f32 %v176, %v174
    %v178 = vmul.f32 %v177, %v176
    %v179 = vmul.f32 0.5, %v178
    %v180 = vsub.f32 1.5, %v179
    %v181 = vmul.f32 %v176, %v180
    %vm182 = vweird.f32 %v174
    %vm183 = vweird.f32 %v176
    %vm184 = vmor %vm182, %vm183
    %v185 = vsel %vm184, %v176, %v181
    %v186 = vrsqrt.pop %v175
    %v187 = vmul.f32 %v186, %v175
    %v188 = vmul.f32 %v187, %v186
    %v189 = vmul.f32 0.5, %v188
    %v190 = vsub.f32 1.5, %v189
    %v191 = vmul.f32 %v186, %v190
    %vm192 = vweird.f32 %v175
    %vm193 = vweird.f32 %v186
    %vm194 = vmor %vm192, %vm193
    %v195 = vsel %vm194, %v186, %v191
    %v196 = vmul.f32 %v172, %v185
    %v197 = vmul.f32 %v173, %v195
    %v198 = vperm.slane %v140, 0
    %v199 = vmul.f32 %v196, %v198
    %v200 = vmul.f32 %v197, %v198
    %v201 = vperm.slane %v140, 1
    %v202 = vadd.f32 %v199, %v201
    %v203 = vadd.f32 %v200, %v201
    %v204 = vperm.slane %v140, 4
    %v206 = vsel %vm142, %v202, 0
    %v209 = vsel %vm142, %v203, 0
    %211 = vmatpush.msra.mxu0 0.0
    %212 = vmatpush.msra.mxu0 0.0
    %213 = vmatpush.msra.mxu0 0.0
    %214 = vmatpush.msra.mxu0 0.0
    %215 = vmatpush.msra.mxu0 0.0
    %216 = vmatpush.msra.mxu0 0.0
    %217 = vmatpush.msra.mxu0 0.0
    %218 = vmatpush.msra.mxu0 0.0
    %219 = vmatpush.msra.mxu0 0.0
    %220 = vmatpush.msra.mxu0 0.0
    %221 = vmatpush.msra.mxu0 0.0
    %222 = vmatpush.msra.mxu0 0.0
    %223 = vmatpush.msra.mxu0 %v115
    %224 = vmatpush.msra.mxu0 %v114
    %225 = vmatpush.msra.mxu0 %v113
    %226 = vmatpush.msra.mxu0 %v112
    %227 = vmatmul.f32.gmra.mxu0 %v206
    %v228 = vpop.f32.mrf.mxu0
    %v229 = vadd.f32 %v204, %v228
    %230 = vmatmul.f32.gmra.mxu0 %v209
    %v231 = vpop.f32.mrf.mxu0
    %v232 = vadd.f32 %v204, %v231
    %233 = vdwg.mxu0
    %v234 = vperm.slane %v140, 5
    %235 = vmatpush.msra.mxu0 0.0
    %236 = vmatpush.msra.mxu0 0.0
    %237 = vmatpush.msra.mxu0 0.0
    %238 = vmatpush.msra.mxu0 0.0
    %239 = vmatpush.msra.mxu0 0.0
    %240 = vmatpush.msra.mxu0 0.0
    %241 = vmatpush.msra.mxu0 0.0
    %242 = vmatpush.msra.mxu0 0.0
    %243 = vmatpush.msra.mxu0 0.0
    %244 = vmatpush.msra.mxu0 0.0
    %245 = vmatpush.msra.mxu0 0.0
    %246 = vmatpush.msra.mxu0 0.0
    %247 = vmatpush.msra.mxu0 %v119
    %248 = vmatpush.msra.mxu0 %v118
    %249 = vmatpush.msra.mxu0 %v117
    %250 = vmatpush.msra.mxu0 %v116
    %251 = vmatmul.f32.gmra.mxu0 %v206
    %v252 = vpop.f32.mrf.mxu0
    %v253 = vadd.f32 %v234, %v252
    %254 = vmatmul.f32.gmra.mxu0 %v209
    %v255 = vpop.f32.mrf.mxu0
    %v256 = vadd.f32 %v234, %v255
    %257 = vdwg.mxu0
    %vm258 = vcmask 130048
    %v260 = vsel %vm258, %v104, 0
    %v263 = vsel %vm258, %v105, 0
    %v266 = vsel %vm258, %v106, 0
    %v269 = vsel %vm258, %v107, 0
    %v272 = vsel %vm258, %v108, 0
    %v275 = vsel %vm258, %v109, 0
    %v278 = vsel %vm258, %v110, 0
    %v281 = vsel %vm258, %v111, 0
    %283 = vmatpush.msra.mxu0 0.0
    %284 = vmatpush.msra.mxu0 0.0
    %285 = vmatpush.msra.mxu0 0.0
    %286 = vmatpush.msra.mxu0 0.0
    %287 = vmatpush.msra.mxu0 0.0
    %288 = vmatpush.msra.mxu0 0.0
    %289 = vmatpush.msra.mxu0 0.0
    %290 = vmatpush.msra.mxu0 0.0
    %291 = vmatpush.msra.mxu0 0.0
    %292 = vmatpush.msra.mxu0 0.0
    %293 = vmatpush.msra.mxu0 0.0
    %294 = vmatpush.msra.mxu0 0.0
    %295 = vmatpush.msra.mxu0 0.0
    %296 = vmatpush.msra.mxu0 0.0
    %297 = vmatpush.msra.mxu0 %v256
    %298 = vmatpush.msra.mxu0 %v253
    %299 = vmatmul.f32.gmra.mxu0 %v260
    %v300 = vpop.f32.mrf.mxu0
    %v301 = vadd.f32 0.0, %v300
    %302 = vmatmul.f32.gmra.mxu0 %v263
    %v303 = vpop.f32.mrf.mxu0
    %v304 = vadd.f32 0.0, %v303
    %305 = vmatmul.f32.gmra.mxu0 %v266
    %v306 = vpop.f32.mrf.mxu0
    %v307 = vadd.f32 0.0, %v306
    %308 = vmatmul.f32.gmra.mxu0 %v269
    %v309 = vpop.f32.mrf.mxu0
    %v310 = vadd.f32 0.0, %v309
    %311 = vmatmul.f32.gmra.mxu0 %v272
    %v312 = vpop.f32.mrf.mxu0
    %v313 = vadd.f32 0.0, %v312
    %314 = vmatmul.f32.gmra.mxu0 %v275
    %v315 = vpop.f32.mrf.mxu0
    %v316 = vadd.f32 0.0, %v315
    %317 = vmatmul.f32.gmra.mxu0 %v278
    %v318 = vpop.f32.mrf.mxu0
    %v319 = vadd.f32 0.0, %v318
    %320 = vmatmul.f32.gmra.mxu0 %v281
    %v321 = vpop.f32.mrf.mxu0
    %v322 = vadd.f32 0.0, %v321
    %323 = vdwg.mxu0
    %v324 = vmul.f32 %v301, %v88
    %v325 = vmul.f32 %v304, %v89
    %v326 = vmul.f32 %v307, %v90
    %v327 = vmul.f32 %v310, %v91
    %v328 = vmul.f32 %v313, %v92
    %v329 = vmul.f32 %v316, %v93
    %v330 = vmul.f32 %v319, %v94
    %v331 = vmul.f32 %v322, %v95
    %vm332 = vcmask 523264
    %v334 = vsel %vm332, %v229, 0
    %v337 = vsel %vm332, %v232, 0
    %v340 = vsel %vm332, %v324, 0
    %v343 = vsel %vm332, %v325, 0
    %v346 = vsel %vm332, %v326, 0
    %v349 = vsel %vm332, %v327, 0
    %v352 = vsel %vm332, %v328, 0
    %v355 = vsel %vm332, %v329, 0
    %v358 = vsel %vm332, %v330, 0
    %v361 = vsel %vm332, %v331, 0
    %363 = vmatpush.xpose.msra.mxu0 0.0
    %364 = vmatpush.xpose.msra.mxu0 0.0
    %365 = vmatpush.xpose.msra.mxu0 0.0
    %366 = vmatpush.xpose.msra.mxu0 0.0
    %367 = vmatpush.xpose.msra.mxu0 0.0
    %368 = vmatpush.xpose.msra.mxu0 0.0
    %369 = vmatpush.xpose.msra.mxu0 0.0
    %370 = vmatpush.xpose.msra.mxu0 0.0
    %371 = vmatpush.xpose.msra.mxu0 %v361
    %372 = vmatpush.xpose.msra.mxu0 %v358
    %373 = vmatpush.xpose.msra.mxu0 %v355
    %374 = vmatpush.xpose.msra.mxu0 %v352
    %375 = vmatpush.xpose.msra.mxu0 %v349
    %376 = vmatpush.xpose.msra.mxu0 %v346
    %377 = vmatpush.xpose.msra.mxu0 %v343
    %378 = vmatpush.xpose.msra.mxu0 %v340
    %379 = vmatmul.f32.gmra.mxu0 %v334
    %v380 = vpop.f32.mrf.mxu0
    %v381 = vadd.f32 %v86, %v380
    %382 = vmatmul.f32.gmra.mxu0 %v337
    %v383 = vpop.f32.mrf.mxu0
    %v384 = vadd.f32 %v87, %v383
    %385 = vdwg.mxu0
    %v386 = vsel %vm332, %v381, -inf
    %387 = vmax.xlane.f32.xlu0 %v386
    %v388 = vpop.xlane.xlu0 %387
    %v389 = vsel %vm332, %v384, -inf
    %390 = vmax.xlane.f32.xlu0 %v389
    %v391 = vpop.xlane.xlu0 %390
    %v392 = vsub.f32 %v381, %v388
    %v393 = vsub.f32 %v384, %v391
    %v394 = vmul.f32 %v392, 1.442695
    %v395 = vpow.pop %v394
    %v396 = vmul.f32 %v393, 1.442695
    %v397 = vpow.pop %v396
    %v399 = vsel %vm332, %v395, 0
    %v402 = vsel %vm332, %v397, 0
    %404 = vmatpush.msra.mxu0 0.0
    %405 = vmatpush.msra.mxu0 0.0
    %406 = vmatpush.msra.mxu0 0.0
    %407 = vmatpush.msra.mxu0 0.0
    %408 = vmatpush.msra.mxu0 0.0
    %409 = vmatpush.msra.mxu0 0.0
    %410 = vmatpush.msra.mxu0 0.0
    %411 = vmatpush.msra.mxu0 0.0
    %412 = vmatpush.msra.mxu0 %v103
    %413 = vmatpush.msra.mxu0 %v102
    %414 = vmatpush.msra.mxu0 %v101
    %415 = vmatpush.msra.mxu0 %v100
    %416 = vmatpush.msra.mxu0 %v99
    %417 = vmatpush.msra.mxu0 %v98
    %418 = vmatpush.msra.mxu0 %v97
    %419 = vmatpush.msra.mxu0 %v96
    %420 = vmatmul.f32.gmra.mxu0 %v399
    %v421 = vpop.f32.mrf.mxu0
    %v422 = vadd.f32 0.0, %v421
    %423 = vmatmul.f32.gmra.mxu0 %v402
    %v424 = vpop.f32.mrf.mxu0
    %v425 = vadd.f32 0.0, %v424
    %426 = vdwg.mxu0
    %v427 = vrcp.pop %v422
    %v428 = vrcp.pop %v425
    %v429 = vmul.f32 %v395, %v427
    %v430 = vmul.f32 %v397, %v428
    %v432 = vsel %vm332, %v429, 0
    %v435 = vsel %vm332, %v430, 0
    %437 = vmatpush.msra.mxu0 0.0
    %438 = vmatpush.msra.mxu0 0.0
    %439 = vmatpush.msra.mxu0 0.0
    %440 = vmatpush.msra.mxu0 0.0
    %441 = vmatpush.msra.mxu0 0.0
    %442 = vmatpush.msra.mxu0 0.0
    %443 = vmatpush.msra.mxu0 0.0
    %444 = vmatpush.msra.mxu0 0.0
    %445 = vmatpush.msra.mxu0 %v331
    %446 = vmatpush.msra.mxu0 %v330
    %447 = vmatpush.msra.mxu0 %v329
    %448 = vmatpush.msra.mxu0 %v328
    %449 = vmatpush.msra.mxu0 %v327
    %450 = vmatpush.msra.mxu0 %v326
    %451 = vmatpush.msra.mxu0 %v325
    %452 = vmatpush.msra.mxu0 %v324
    %453 = vmatmul.f32.gmra.mxu0 %v432
    %v454 = vpop.f32.mrf.mxu0
    %v455 = vadd.f32 0.0, %v454
    %456 = vmatmul.f32.gmra.mxu0 %v435
    %v457 = vpop.f32.mrf.mxu0
    %v458 = vadd.f32 0.0, %v457
    %459 = vdwg.mxu0
    %v460 = vperm.slane %v140, 6
    %v462 = vsel %vm332, %v455, 0
    %v465 = vsel %vm332, %v458, 0
    %467 = vmatpush.msra.mxu0 0.0
    %468 = vmatpush.msra.mxu0 0.0
    %469 = vmatpush.msra.mxu0 0.0
    %470 = vmatpush.msra.mxu0 0.0
    %471 = vmatpush.msra.mxu0 0.0
    %472 = vmatpush.msra.mxu0 0.0
    %473 = vmatpush.msra.mxu0 0.0
    %474 = vmatpush.msra.mxu0 0.0
    %475 = vmatpush.msra.mxu0 %v127
    %476 = vmatpush.msra.mxu0 %v126
    %477 = vmatpush.msra.mxu0 %v125
    %478 = vmatpush.msra.mxu0 %v124
    %479 = vmatpush.msra.mxu0 %v123
    %480 = vmatpush.msra.mxu0 %v122
    %481 = vmatpush.msra.mxu0 %v121
    %482 = vmatpush.msra.mxu0 %v120
    %483 = vmatmul.f32.gmra.mxu0 %v462
    %v484 = vpop.f32.mrf.mxu0
    %v485 = vadd.f32 %v460, %v484
    %486 = vmatmul.f32.gmra.mxu0 %v465
    %v487 = vpop.f32.mrf.mxu0
    %v488 = vadd.f32 %v460, %v487
    %489 = vdwg.mxu0
    %v490 = vadd.f32 %v485, %v202
    %v491 = vadd.f32 %v488, %v203
    %v492 = vsel %vm142, %v490, 0.0
    %493 = vadd.xlane.f32.xlu0 %v492
    %v494 = vpop.xlane.xlu0 %493
    %v495 = vsel %vm142, %v491, 0.0
    %496 = vadd.xlane.f32.xlu0 %v495
    %v497 = vpop.xlane.xlu0 %496
    %v498 = vmul.f32 %v494, %v155
    %v499 = vmul.f32 %v497, %v155
    %v500 = vmul.f32 %v490, %v490
    %v501 = vmul.f32 %v491, %v491
    %v502 = vsel %vm142, %v500, 0.0
    %503 = vadd.xlane.f32.xlu0 %v502
    %v504 = vpop.xlane.xlu0 %503
    %v505 = vsel %vm142, %v501, 0.0
    %506 = vadd.xlane.f32.xlu0 %v505
    %v507 = vpop.xlane.xlu0 %506
    %v508 = vmul.f32 %v504, %v155
    %v509 = vmul.f32 %v507, %v155
    %v510 = vmul.f32 %v498, %v498
    %v511 = vmul.f32 %v499, %v499
    %v512 = vsub.f32 %v508, %v510
    %v513 = vsub.f32 %v509, %v511
    %v514 = vsub.f32 %v490, %v498
    %v515 = vsub.f32 %v491, %v499
    %v516 = vadd.f32 %v512, 1e-12
    %v517 = vadd.f32 %v513, 1e-12
    %v518 = vrsqrt.pop %v516
    %v519 = vmul.f32 %v518, %v516
    %v520 = vmul.f32 %v519, %v518
    %v521 = vmul.f32 0.5, %v520
    %v522 = vsub.f32 1.5, %v521
    %v523 = vmul.f32 %v518, %v522
    %vm524 = vweird.f32 %v516
    %vm525 = vweird.f32 %v518
    %vm526 = vmor %vm524, %vm525
    %v527 = vsel %vm526, %v518, %v523
    %v528 = vrsqrt.pop %v517
    %v529 = vmul.f32 %v528, %v517
    %v530 = vmul.f32 %v529, %v528
    %v531 = vmul.f32 0.5, %v530
    %v532 = vsub.f32 1.5, %v531
    %v533 = vmul.f32 %v528, %v532
    %vm534 = vweird.f32 %v517
    %vm535 = vweird.f32 %v528
    %vm536 = vmor %vm534, %vm535
    %v537 = vsel %vm536, %v528, %v533
    %v538 = vmul.f32 %v514, %v527
    %v539 = vmul.f32 %v515, %v537
    %v540 = vperm.slane %v140, 2
    %v541 = vmul.f32 %v538, %v540
    %v542 = vmul.f32 %v539, %v540
    %v543 = vperm.slane %v140, 3
    %v544 = vadd.f32 %v541, %v543
    %v545 = vadd.f32 %v542, %v543
    %v546 = vperm.slane %v140, 7
    %v548 = vsel %vm142, %v544, 0
    %v551 = vsel %vm142, %v545, 0
    %553 = vmatpush.msra.mxu0 0.0
    %554 = vmatpush.msra.mxu0 0.0
    %555 = vmatpush.msra.mxu0 0.0
    %556 = vmatpush.msra.mxu0 0.0
    %557 = vmatpush.msra.mxu0 0.0
    %558 = vmatpush.msra.mxu0 0.0
    %559 = vmatpush.msra.mxu0 0.0
    %560 = vmatpush.msra.mxu0 0.0
    %561 = vmatpush.msra.mxu0 0.0
    %562 = vmatpush.msra.mxu0 0.0
    %563 = vmatpush.msra.mxu0 0.0
    %564 = vmatpush.msra.mxu0 0.0
    %565 = vmatpush.msra.mxu0 %v131
    %566 = vmatpush.msra.mxu0 %v130
    %567 = vmatpush.msra.mxu0 %v129
    %568 = vmatpush.msra.mxu0 %v128
    %569 = vmatmul.f32.gmra.mxu0 %v548
    %v570 = vpop.f32.mrf.mxu0
    %v571 = vadd.f32 %v546, %v570
    %572 = vmatmul.f32.gmra.mxu0 %v551
    %v573 = vpop.f32.mrf.mxu0
    %v574 = vadd.f32 %v546, %v573
    %575 = vdwg.mxu0
    %v576 = vmax.f32 %v571, 0.0
    %v577 = vmax.f32 %v574, 0.0
    %v578 = vperm.slane %v141, 0
    %v580 = vsel %vm332, %v576, 0
    %v583 = vsel %vm332, %v577, 0
    %585 = vmatpush.msra.mxu0 0.0
    %586 = vmatpush.msra.mxu0 0.0
    %587 = vmatpush.msra.mxu0 0.0
    %588 = vmatpush.msra.mxu0 0.0
    %589 = vmatpush.msra.mxu0 0.0
    %590 = vmatpush.msra.mxu0 0.0
    %591 = vmatpush.msra.mxu0 0.0
    %592 = vmatpush.msra.mxu0 0.0
    %593 = vmatpush.msra.mxu0 %v139
    %594 = vmatpush.msra.mxu0 %v138
    %595 = vmatpush.msra.mxu0 %v137
    %596 = vmatpush.msra.mxu0 %v136
    %597 = vmatpush.msra.mxu0 %v135
    %598 = vmatpush.msra.mxu0 %v134
    %599 = vmatpush.msra.mxu0 %v133
    %600 = vmatpush.msra.mxu0 %v132
    %601 = vmatmul.f32.gmra.mxu0 %v580
    %v602 = vpop.f32.mrf.mxu0
    %v603 = vadd.f32 %v578, %v602
    %604 = vmatmul.f32.gmra.mxu0 %v583
    %v605 = vpop.f32.mrf.mxu0
    %v606 = vadd.f32 %v578, %v605
    %607 = vdwg.mxu0
    %v608 = vadd.f32 %v603, %v544
    %v609 = vadd.f32 %v606, %v545
    %v610 = vld [vmem:[#allocation2 + $0x238] sm:$0xff]
    %v611 = vld [vmem:[#allocation2 + $0x240] sm:$0xff]
    %v612 = vld [vmem:[#allocation2 + $0x248] sm:$0xff]
    %v613 = vld [vmem:[#allocation2 + $0x250] sm:$0xff]
    %v614 = vld [vmem:[#allocation2 + $0x258] sm:$0xff]
    %v615 = vld [vmem:[#allocation2 + $0x260] sm:$0xff]
    %v616 = vld [vmem:[#allocation2 + $0x268] sm:$0xff]
    %v617 = vld [vmem:[#allocation2 + $0x270] sm:$0xff]
    %v618 = vld [vmem:[#allocation2 + $0x278] sm:$0xff]
    %v619 = vld [vmem:[#allocation2 + $0x280] sm:$0xff]
    %v620 = vld [vmem:[#allocation2 + $0x288] sm:$0xff]
    %v621 = vld [vmem:[#allocation2 + $0x290] sm:$0xff]
    %v622 = vld [vmem:[#allocation2 + $0x298] sm:$0xff]
    %v623 = vld [vmem:[#allocation2 + $0x2a0] sm:$0xff]
    %v624 = vld [vmem:[#allocation2 + $0x2a8] sm:$0xff]
    %v625 = vld [vmem:[#allocation2 + $0x2b0] sm:$0xff]
    %v626 = vld [vmem:[#allocation2 + $0x2b8] sm:$0xff]
    %v627 = vld [vmem:[#allocation2 + $0x2c0] sm:$0xff]
    %v628 = vld [vmem:[#allocation2 + $0x2c8] sm:$0xff]
    %v629 = vld [vmem:[#allocation2 + $0x2d0] sm:$0xff]
    %v630 = vld [vmem:[#allocation2 + $0x2d8] sm:$0xff]
    %v631 = vld [vmem:[#allocation2 + $0x2e0] sm:$0xff]
    %v632 = vld [vmem:[#allocation2 + $0x2e8] sm:$0xff]
    %v633 = vld [vmem:[#allocation2 + $0x2f0] sm:$0xff]
    %v634 = vld [vmem:[#allocation2 + $0x2f8] sm:$0xff]
    %v635 = vld [vmem:[#allocation2 + $0x300] sm:$0xff]
    %v636 = vld [vmem:[#allocation2 + $0x308] sm:$0xff]
    %v637 = vld [vmem:[#allocation2 + $0x310] sm:$0xff]
    %v638 = vld [vmem:[#allocation2 + $0x318] sm:$0xff]
    %v639 = vld [vmem:[#allocation2 + $0x320] sm:$0x1]
    %v640 = vsel %vm142, %v608, 0.0
    %641 = vadd.xlane.f32.xlu0 %v640
    %v642 = vpop.xlane.xlu0 %641
    %v643 = vsel %vm142, %v609, 0.0
    %644 = vadd.xlane.f32.xlu0 %v643
    %v645 = vpop.xlane.xlu0 %644
    %v646 = vmul.f32 %v642, %v155
    %v647 = vmul.f32 %v645, %v155
    %v648 = vmul.f32 %v608, %v608
    %v649 = vmul.f32 %v609, %v609
    %v650 = vsel %vm142, %v648, 0.0
    %651 = vadd.xlane.f32.xlu0 %v650
    %v652 = vpop.xlane.xlu0 %651
    %v653 = vsel %vm142, %v649, 0.0
    %654 = vadd.xlane.f32.xlu0 %v653
    %v655 = vpop.xlane.xlu0 %654
    %v656 = vmul.f32 %v652, %v155
    %v657 = vmul.f32 %v655, %v155
    %v658 = vmul.f32 %v646, %v646
    %v659 = vmul.f32 %v647, %v647
    %v660 = vsub.f32 %v656, %v658
    %v661 = vsub.f32 %v657, %v659
    %v662 = vsub.f32 %v608, %v646
    %v663 = vsub.f32 %v609, %v647
    %v664 = vadd.f32 %v660, 1e-12
    %v665 = vadd.f32 %v661, 1e-12
    %v666 = vrsqrt.pop %v664
    %v667 = vmul.f32 %v666, %v664
    %v668 = vmul.f32 %v667, %v666
    %v669 = vmul.f32 0.5, %v668
    %v670 = vsub.f32 1.5, %v669
    %v671 = vmul.f32 %v666, %v670
    %vm672 = vweird.f32 %v664
    %vm673 = vweird.f32 %v666
    %vm674 = vmor %vm672, %vm673
    %v675 = vsel %vm674, %v666, %v671
    %v676 = vrsqrt.pop %v665
    %v677 = vmul.f32 %v676, %v665
    %v678 = vmul.f32 %v677, %v676
    %v679 = vmul.f32 0.5, %v678
    %v680 = vsub.f32 1.5, %v679
    %v681 = vmul.f32 %v676, %v680
    %vm682 = vweird.f32 %v665
    %vm683 = vweird.f32 %v676
    %vm684 = vmor %vm682, %vm683
    %v685 = vsel %vm684, %v676, %v681
    %v686 = vmul.f32 %v662, %v675
    %v687 = vmul.f32 %v663, %v685
    %v688 = vperm.slane %v638, 0
    %v689 = vmul.f32 %v686, %v688
    %v690 = vmul.f32 %v687, %v688
    %v691 = vperm.slane %v638, 1
    %v692 = vadd.f32 %v689, %v691
    %v693 = vadd.f32 %v690, %v691
    %v694 = vperm.slane %v638, 4
    %v696 = vsel %vm142, %v692, 0
    %v699 = vsel %vm142, %v693, 0
    %701 = vmatpush.msra.mxu0 0.0
    %702 = vmatpush.msra.mxu0 0.0
    %703 = vmatpush.msra.mxu0 0.0
    %704 = vmatpush.msra.mxu0 0.0
    %705 = vmatpush.msra.mxu0 0.0
    %706 = vmatpush.msra.mxu0 0.0
    %707 = vmatpush.msra.mxu0 0.0
    %708 = vmatpush.msra.mxu0 0.0
    %709 = vmatpush.msra.mxu0 0.0
    %710 = vmatpush.msra.mxu0 0.0
    %711 = vmatpush.msra.mxu0 0.0
    %712 = vmatpush.msra.mxu0 0.0
    %713 = vmatpush.msra.mxu0 %v613
    %714 = vmatpush.msra.mxu0 %v612
    %715 = vmatpush.msra.mxu0 %v611
    %716 = vmatpush.msra.mxu0 %v610
    %717 = vmatmul.f32.gmra.mxu0 %v696
    %v718 = vpop.f32.mrf.mxu0
    %v719 = vadd.f32 %v694, %v718
    %720 = vmatmul.f32.gmra.mxu0 %v699
    %v721 = vpop.f32.mrf.mxu0
    %v722 = vadd.f32 %v694, %v721
    %723 = vdwg.mxu0
    %v724 = vperm.slane %v638, 5
    %725 = vmatpush.msra.mxu0 0.0
    %726 = vmatpush.msra.mxu0 0.0
    %727 = vmatpush.msra.mxu0 0.0
    %728 = vmatpush.msra.mxu0 0.0
    %729 = vmatpush.msra.mxu0 0.0
    %730 = vmatpush.msra.mxu0 0.0
    %731 = vmatpush.msra.mxu0 0.0
    %732 = vmatpush.msra.mxu0 0.0
    %733 = vmatpush.msra.mxu0 0.0
    %734 = vmatpush.msra.mxu0 0.0
    %735 = vmatpush.msra.mxu0 0.0
    %736 = vmatpush.msra.mxu0 0.0
    %737 = vmatpush.msra.mxu0 %v617
    %738 = vmatpush.msra.mxu0 %v616
    %739 = vmatpush.msra.mxu0 %v615
    %740 = vmatpush.msra.mxu0 %v614
    %741 = vmatmul.f32.gmra.mxu0 %v696
    %v742 = vpop.f32.mrf.mxu0
    %v743 = vadd.f32 %v724, %v742
    %744 = vmatmul.f32.gmra.mxu0 %v699
    %v745 = vpop.f32.mrf.mxu0
    %v746 = vadd.f32 %v724, %v745
    %747 = vdwg.mxu0
    %748 = vmatpush.msra.mxu0 0.0
    %749 = vmatpush.msra.mxu0 0.0
    %750 = vmatpush.msra.mxu0 0.0
    %751 = vmatpush.msra.mxu0 0.0
    %752 = vmatpush.msra.mxu0 0.0
    %753 = vmatpush.msra.mxu0 0.0
    %754 = vmatpush.msra.mxu0 0.0
    %755 = vmatpush.msra.mxu0 0.0
    %756 = vmatpush.msra.mxu0 0.0
    %757 = vmatpush.msra.mxu0 0.0
    %758 = vmatpush.msra.mxu0 0.0
    %759 = vmatpush.msra.mxu0 0.0
    %760 = vmatpush.msra.mxu0 0.0
    %761 = vmatpush.msra.mxu0 0.0
    %762 = vmatpush.msra.mxu0 %v746
    %763 = vmatpush.msra.mxu0 %v743
    %764 = vmatmul.f32.gmra.mxu0 %v260
    %v765 = vpop.f32.mrf.mxu0
    %v766 = vadd.f32 0.0, %v765
    %767 = vmatmul.f32.gmra.mxu0 %v263
    %v768 = vpop.f32.mrf.mxu0
    %v769 = vadd.f32 0.0, %v768
    %770 = vmatmul.f32.gmra.mxu0 %v266
    %v771 = vpop.f32.mrf.mxu0
    %v772 = vadd.f32 0.0, %v771
    %773 = vmatmul.f32.gmra.mxu0 %v269
    %v774 = vpop.f32.mrf.mxu0
    %v775 = vadd.f32 0.0, %v774
    %776 = vmatmul.f32.gmra.mxu0 %v272
    %v777 = vpop.f32.mrf.mxu0
    %v778 = vadd.f32 0.0, %v777
    %779 = vmatmul.f32.gmra.mxu0 %v275
    %v780 = vpop.f32.mrf.mxu0
    %v781 = vadd.f32 0.0, %v780
    %782 = vmatmul.f32.gmra.mxu0 %v278
    %v783 = vpop.f32.mrf.mxu0
    %v784 = vadd.f32 0.0, %v783
    %785 = vmatmul.f32.gmra.mxu0 %v281
    %v786 = vpop.f32.mrf.mxu0
    %v787 = vadd.f32 0.0, %v786
    %788 = vdwg.mxu0
    %v789 = vmul.f32 %v766, %v88
    %v790 = vmul.f32 %v769, %v89
    %v791 = vmul.f32 %v772, %v90
    %v792 = vmul.f32 %v775, %v91
    %v793 = vmul.f32 %v778, %v92
    %v794 = vmul.f32 %v781, %v93
    %v795 = vmul.f32 %v784, %v94
    %v796 = vmul.f32 %v787, %v95
    %v798 = vsel %vm332, %v719, 0
    %v801 = vsel %vm332, %v722, 0
    %v804 = vsel %vm332, %v789, 0
    %v807 = vsel %vm332, %v790, 0
    %v810 = vsel %vm332, %v791, 0
    %v813 = vsel %vm332, %v792, 0
    %v816 = vsel %vm332, %v793, 0
    %v819 = vsel %vm332, %v794, 0
    %v822 = vsel %vm332, %v795, 0
    %v825 = vsel %vm332, %v796, 0
    %827 = vmatpush.xpose.msra.mxu0 0.0
    %828 = vmatpush.xpose.msra.mxu0 0.0
    %829 = vmatpush.xpose.msra.mxu0 0.0
    %830 = vmatpush.xpose.msra.mxu0 0.0
    %831 = vmatpush.xpose.msra.mxu0 0.0
    %832 = vmatpush.xpose.msra.mxu0 0.0
    %833 = vmatpush.xpose.msra.mxu0 0.0
    %834 = vmatpush.xpose.msra.mxu0 0.0
    %835 = vmatpush.xpose.msra.mxu0 %v825
    %836 = vmatpush.xpose.msra.mxu0 %v822
    %837 = vmatpush.xpose.msra.mxu0 %v819
    %838 = vmatpush.xpose.msra.mxu0 %v816
    %839 = vmatpush.xpose.msra.mxu0 %v813
    %840 = vmatpush.xpose.msra.mxu0 %v810
    %841 = vmatpush.xpose.msra.mxu0 %v807
    %842 = vmatpush.xpose.msra.mxu0 %v804
    %843 = vmatmul.f32.gmra.mxu0 %v798
    %v844 = vpop.f32.mrf.mxu0
    %v845 = vadd.f32 %v86, %v844
    %846 = vmatmul.f32.gmra.mxu0 %v801
    %v847 = vpop.f32.mrf.mxu0
    %v848 = vadd.f32 %v87, %v847
    %849 = vdwg.mxu0
    %v850 = vsel %vm332, %v845, -inf
    %851 = vmax.xlane.f32.xlu0 %v850
    %v852 = vpop.xlane.xlu0 %851
    %v853 = vsel %vm332, %v848, -inf
    %854 = vmax.xlane.f32.xlu0 %v853
    %v855 = vpop.xlane.xlu0 %854
    %v856 = vsub.f32 %v845, %v852
    %v857 = vsub.f32 %v848, %v855
    %v858 = vmul.f32 %v856, 1.442695
    %v859 = vpow.pop %v858
    %v860 = vmul.f32 %v857, 1.442695
    %v861 = vpow.pop %v860
    %v863 = vsel %vm332, %v859, 0
    %v866 = vsel %vm332, %v861, 0
    %868 = vmatpush.msra.mxu0 0.0
    %869 = vmatpush.msra.mxu0 0.0
    %870 = vmatpush.msra.mxu0 0.0
    %871 = vmatpush.msra.mxu0 0.0
    %872 = vmatpush.msra.mxu0 0.0
    %873 = vmatpush.msra.mxu0 0.0
    %874 = vmatpush.msra.mxu0 0.0
    %875 = vmatpush.msra.mxu0 0.0
    %876 = vmatpush.msra.mxu0 %v103
    %877 = vmatpush.msra.mxu0 %v102
    %878 = vmatpush.msra.mxu0 %v101
    %879 = vmatpush.msra.mxu0 %v100
    %880 = vmatpush.msra.mxu0 %v99
    %881 = vmatpush.msra.mxu0 %v98
    %882 = vmatpush.msra.mxu0 %v97
    %883 = vmatpush.msra.mxu0 %v96
    %884 = vmatmul.f32.gmra.mxu0 %v863
    %v885 = vpop.f32.mrf.mxu0
    %v886 = vadd.f32 0.0, %v885
    %887 = vmatmul.f32.gmra.mxu0 %v866
    %v888 = vpop.f32.mrf.mxu0
    %v889 = vadd.f32 0.0, %v888
    %890 = vdwg.mxu0
    %v891 = vrcp.pop %v886
    %v892 = vrcp.pop %v889
    %v893 = vmul.f32 %v859, %v891
    %v894 = vmul.f32 %v861, %v892
    %v896 = vsel %vm332, %v893, 0
    %v899 = vsel %vm332, %v894, 0
    %901 = vmatpush.msra.mxu0 0.0
    %902 = vmatpush.msra.mxu0 0.0
    %903 = vmatpush.msra.mxu0 0.0
    %904 = vmatpush.msra.mxu0 0.0
    %905 = vmatpush.msra.mxu0 0.0
    %906 = vmatpush.msra.mxu0 0.0
    %907 = vmatpush.msra.mxu0 0.0
    %908 = vmatpush.msra.mxu0 0.0
    %909 = vmatpush.msra.mxu0 %v796
    %910 = vmatpush.msra.mxu0 %v795
    %911 = vmatpush.msra.mxu0 %v794
    %912 = vmatpush.msra.mxu0 %v793
    %913 = vmatpush.msra.mxu0 %v792
    %914 = vmatpush.msra.mxu0 %v791
    %915 = vmatpush.msra.mxu0 %v790
    %916 = vmatpush.msra.mxu0 %v789
    %917 = vmatmul.f32.gmra.mxu0 %v896
    %v918 = vpop.f32.mrf.mxu0
    %v919 = vadd.f32 0.0, %v918
    %920 = vmatmul.f32.gmra.mxu0 %v899
    %v921 = vpop.f32.mrf.mxu0
    %v922 = vadd.f32 0.0, %v921
    %923 = vdwg.mxu0
    %v924 = vperm.slane %v638, 6
    %v926 = vsel %vm332, %v919, 0
    %v929 = vsel %vm332, %v922, 0
    %931 = vmatpush.msra.mxu0 0.0
    %932 = vmatpush.msra.mxu0 0.0
    %933 = vmatpush.msra.mxu0 0.0
    %934 = vmatpush.msra.mxu0 0.0
    %935 = vmatpush.msra.mxu0 0.0
    %936 = vmatpush.msra.mxu0 0.0
    %937 = vmatpush.msra.mxu0 0.0
    %938 = vmatpush.msra.mxu0 0.0
    %939 = vmatpush.msra.mxu0 %v625
    %940 = vmatpush.msra.mxu0 %v624
    %941 = vmatpush.msra.mxu0 %v623
    %942 = vmatpush.msra.mxu0 %v622
    %943 = vmatpush.msra.mxu0 %v621
    %944 = vmatpush.msra.mxu0 %v620
    %945 = vmatpush.msra.mxu0 %v619
    %946 = vmatpush.msra.mxu0 %v618
    %947 = vmatmul.f32.gmra.mxu0 %v926
    %v948 = vpop.f32.mrf.mxu0
    %v949 = vadd.f32 %v924, %v948
    %950 = vmatmul.f32.gmra.mxu0 %v929
    %v951 = vpop.f32.mrf.mxu0
    %v952 = vadd.f32 %v924, %v951
    %953 = vdwg.mxu0
    %v954 = vadd.f32 %v949, %v692
    %v955 = vadd.f32 %v952, %v693
    %v956 = vsel %vm142, %v954, 0.0
    %957 = vadd.xlane.f32.xlu0 %v956
    %v958 = vpop.xlane.xlu0 %957
    %v959 = vsel %vm142, %v955, 0.0
    %960 = vadd.xlane.f32.xlu0 %v959
    %v961 = vpop.xlane.xlu0 %960
    %v962 = vmul.f32 %v958, %v155
    %v963 = vmul.f32 %v961, %v155
    %v964 = vmul.f32 %v954, %v954
    %v965 = vmul.f32 %v955, %v955
    %v966 = vsel %vm142, %v964, 0.0
    %967 = vadd.xlane.f32.xlu0 %v966
    %v968 = vpop.xlane.xlu0 %967
    %v969 = vsel %vm142, %v965, 0.0
    %970 = vadd.xlane.f32.xlu0 %v969
    %v971 = vpop.xlane.xlu0 %970
    %v972 = vmul.f32 %v968, %v155
    %v973 = vmul.f32 %v971, %v155
    %v974 = vmul.f32 %v962, %v962
    %v975 = vmul.f32 %v963, %v963
    %v976 = vsub.f32 %v972, %v974
    %v977 = vsub.f32 %v973, %v975
    %v978 = vsub.f32 %v954, %v962
    %v979 = vsub.f32 %v955, %v963
    %v980 = vadd.f32 %v976, 1e-12
    %v981 = vadd.f32 %v977, 1e-12
    %v982 = vrsqrt.pop %v980
    %v983 = vmul.f32 %v982, %v980
    %v984 = vmul.f32 %v983, %v982
    %v985 = vmul.f32 0.5, %v984
    %v986 = vsub.f32 1.5, %v985
    %v987 = vmul.f32 %v982, %v986
    %vm988 = vweird.f32 %v980
    %vm989 = vweird.f32 %v982
    %vm990 = vmor %vm988, %vm989
    %v991 = vsel %vm990, %v982, %v987
    %v992 = vrsqrt.pop %v981
    %v993 = vmul.f32 %v992, %v981
    %v994 = vmul.f32 %v993, %v992
    %v995 = vmul.f32 0.5, %v994
    %v996 = vsub.f32 1.5, %v995
    %v997 = vmul.f32 %v992, %v996
    %vm998 = vweird.f32 %v981
    %vm999 = vweird.f32 %v992
    %vm1000 = vmor %vm998, %vm999
    %v1001 = vsel %vm1000, %v992, %v997
    %v1002 = vmul.f32 %v978, %v991
    %v1003 = vmul.f32 %v979, %v1001
    %v1004 = vperm.slane %v638, 2
    %v1005 = vmul.f32 %v1002, %v1004
    %v1006 = vmul.f32 %v1003, %v1004
    %v1007 = vperm.slane %v638, 3
    %v1008 = vadd.f32 %v1005, %v1007
    %v1009 = vadd.f32 %v1006, %v1007
    %v1010 = vperm.slane %v638, 7
    %v1012 = vsel %vm142, %v1008, 0
    %v1015 = vsel %vm142, %v1009, 0
    %1017 = vmatpush.msra.mxu0 0.0
    %1018 = vmatpush.msra.mxu0 0.0
    %1019 = vmatpush.msra.mxu0 0.0
    %1020 = vmatpush.msra.mxu0 0.0
    %1021 = vmatpush.msra.mxu0 0.0
    %1022 = vmatpush.msra.mxu0 0.0
    %1023 = vmatpush.msra.mxu0 0.0
    %1024 = vmatpush.msra.mxu0 0.0
    %1025 = vmatpush.msra.mxu0 0.0
    %1026 = vmatpush.msra.mxu0 0.0
    %1027 = vmatpush.msra.mxu0 0.0
    %1028 = vmatpush.msra.mxu0 0.0
    %1029 = vmatpush.msra.mxu0 %v629
    %1030 = vmatpush.msra.mxu0 %v628
    %1031 = vmatpush.msra.mxu0 %v627
    %1032 = vmatpush.msra.mxu0 %v626
    %1033 = vmatmul.f32.gmra.mxu0 %v1012
    %v1034 = vpop.f32.mrf.mxu0
    %v1035 = vadd.f32 %v1010, %v1034
    %1036 = vmatmul.f32.gmra.mxu0 %v1015
    %v1037 = vpop.f32.mrf.mxu0
    %v1038 = vadd.f32 %v1010, %v1037
    %1039 = vdwg.mxu0
    %v1040 = vmax.f32 %v1035, 0.0
    %v1041 = vmax.f32 %v1038, 0.0
    %v1042 = vperm.slane %v639, 0
    %v1044 = vsel %vm332, %v1040, 0
    %v1047 = vsel %vm332, %v1041, 0
    %1049 = vmatpush.msra.mxu0 0.0
    %1050 = vmatpush.msra.mxu0 0.0
    %1051 = vmatpush.msra.mxu0 0.0
    %1052 = vmatpush.msra.mxu0 0.0
    %1053 = vmatpush.msra.mxu0 0.0
    %1054 = vmatpush.msra.mxu0 0.0
    %1055 = vmatpush.msra.mxu0 0.0
    %1056 = vmatpush.msra.mxu0 0.0
    %1057 = vmatpush.msra.mxu0 %v637
    %1058 = vmatpush.msra.mxu0 %v636
    %1059 = vmatpush.msra.mxu0 %v635
    %1060 = vmatpush.msra.mxu0 %v634
    %1061 = vmatpush.msra.mxu0 %v633
    %1062 = vmatpush.msra.mxu0 %v632
    %1063 = vmatpush.msra.mxu0 %v631
    %1064 = vmatpush.msra.mxu0 %v630
    %1065 = vmatmul.f32.gmra.mxu0 %v1044
    %v1066 = vpop.f32.mrf.mxu0
    %v1067 = vadd.f32 %v1042, %v1066
    %1068 = vmatmul.f32.gmra.mxu0 %v1047
    %v1069 = vpop.f32.mrf.mxu0
    %v1070 = vadd.f32 %v1042, %v1069
    %1071 = vdwg.mxu0
    %v1072 = vadd.f32 %v1067, %v1008
    %v1073 = vadd.f32 %v1070, %v1009
    %v1074 = vld [vmem:[%s1] sm:$0xff]
    %v1075 = vld [vmem:[%s1 + $0x8] sm:$0xff]
    %1077 = vset.pattern.permute.xlu0 0
    %1078 = vperm.xlu0 %1077, %v1074
    %v1079 = vpop.permute.xlu0 %1078
    %1082 = vset.pattern.permute.xlu0 0
    %1083 = vperm.xlu0 %1082, %v1075
    %v1084 = vpop.permute.xlu0 %1083
    %v1086 = vmul.f32 %v1072, %v1079
    %v1087 = vmul.f32 %v1073, %v1084
    %v1088 = vld [vmem:[#allocation2 + $0x118] sm:$0x3]
    %v1090 = vsel %vm258, %v1088, 0
    %1092 = vmatpush.msra.mxu0 0.0
    %1093 = vmatpush.msra.mxu0 0.0
    %1094 = vmatpush.msra.mxu0 0.0
    %1095 = vmatpush.msra.mxu0 0.0
    %1096 = vmatpush.msra.mxu0 0.0
    %1097 = vmatpush.msra.mxu0 0.0
    %1098 = vmatpush.msra.mxu0 0.0
    %1099 = vmatpush.msra.mxu0 0.0
    %1100 = vmatpush.msra.mxu0 0.0
    %1101 = vmatpush.msra.mxu0 0.0
    %1102 = vmatpush.msra.mxu0 0.0
    %1103 = vmatpush.msra.mxu0 0.0
    %1104 = vmatpush.msra.mxu0 0.0
    %1105 = vmatpush.msra.mxu0 0.0
    %1106 = vmatpush.msra.mxu0 %v1087
    %1107 = vmatpush.msra.mxu0 %v1086
    %1108 = vmatmul.f32.gmra.mxu0 %v1090
    %v1109 = vpop.f32.mrf.mxu0
    %v1110 = vadd.f32 0.0, %v1109
    %1111 = vdwg.mxu0
    %v1112 = vld [vmem:[#allocation2 + $0x120] sm:$0xff]
    %v1113 = vld [vmem:[#allocation2 + $0x128] sm:$0xff]
    %v1114 = vld [vmem:[#allocation2 + $0x130] sm:$0xff]
    %v1115 = vld [vmem:[#allocation2 + $0x138] sm:$0xff]
    %v1116 = vld [vmem:[#allocation2 + $0x140] sm:$0x1]
    %v1117 = vperm.slane %v1116, 0
    %v1119 = vsel %vm142, %v1110, 0
    %1121 = vmatpush.msra.mxu0 0.0
    %1122 = vmatpush.msra.mxu0 0.0
    %1123 = vmatpush.msra.mxu0 0.0
    %1124 = vmatpush.msra.mxu0 0.0
    %1125 = vmatpush.msra.mxu0 0.0
    %1126 = vmatpush.msra.mxu0 0.0
    %1127 = vmatpush.msra.mxu0 0.0
    %1128 = vmatpush.msra.mxu0 0.0
    %1129 = vmatpush.msra.mxu0 0.0
    %1130 = vmatpush.msra.mxu0 0.0
    %1131 = vmatpush.msra.mxu0 0.0
    %1132 = vmatpush.msra.mxu0 0.0
    %1133 = vmatpush.msra.mxu0 %v1115
    %1134 = vmatpush.msra.mxu0 %v1114
    %1135 = vmatpush.msra.mxu0 %v1113
    %1136 = vmatpush.msra.mxu0 %v1112
    %1137 = vmatmul.f32.gmra.mxu0 %v1119
    %v1138 = vpop.f32.mrf.mxu0
    %v1139 = vadd.f32 %v1117, %v1138
    %1140 = vdwg.mxu0
    %1141 = vst [vmem:[#allocation5] sm:$0x3] %v1139
    // Predicated region
    $region18: #{forward_pallas.1} parent=1 // pred_check
      _
    $region19: #{forward_pallas.1} parent=1 // pred_check_branch
      %1143 = sbr.rel (0) target = $region21
    $region20: #{forward_pallas.1} parent=1 // pred_region
      %1145 = vsyncadd [#allocation4], 0
      %s1147 = sshll.u32 [#allocation5], 4
      %s1148 = int_to_ptr.vmem [resolvable:$true] %s1147
      %s1149 = sshll.u32 %s3, 4
      %s1150 = int_to_ptr.hbm [resolvable:$true] %s1149
      %1152 = dma.vmem_to_hbm [thread:$0]  %s1148, 32, %s1150, [#allocation4]
    $region21: #{forward_pallas.1} parent=1 // pred_fallthru
      _
    // Predicated region
    $region22: #{forward_pallas.1} parent=1 // pred_check
      _
    $region23: #{forward_pallas.1} parent=1 // pred_check_branch
      %1154 = sbr.rel (0) target = $region25
    $region24: #{forward_pallas.1} parent=1 // pred_region
      %1156 = dma.done [#allocation4], 32
    $region25: #{forward_pallas.1} parent=1 // pred_fallthru
      _
    %1157 = vsyncpa [#allocation3], 1
    %1158 = vsyncpa [#allocation4], 1

</llo_original>
